<compile_context>
chip_gen: v5e
topology: v5e:2x2
jax: 0.10.0
libtpu: 0.0.40
codegen_flags: <defaults>
</compile_context>

<pallas_src>
import jax
import jax.numpy as jnp
from jax import lax
from jax.experimental import pallas as pl
from jax.experimental.pallas import tpu as pltpu


LOCATIONS = ["shake", "phone"]
MODALITIES = ["audio", "acc"]
HIDDEN_DIM = 128   # lane-aligned latent dimension
_EPS = 1e-12


def _round_up(n, m):
    return ((n + m - 1) // m) * m


# ----------------------------------------------------------------------------
# Fused kernel.  grid = (M tiles ["parallel"], K tiles ["arbitrary"]).
# ----------------------------------------------------------------------------
def _gmc_kernel(xa_ref, xc_ref, wa_ref, wc_ref, wja_ref, wjb_ref,
                bias_ref, wp_ref,
                oa_ref, oc_ref, oj_ref,
                acc_a, acc_c, acc_j, h_scr):
    k = pl.program_id(1)

    @pl.when(k == 0)
    def _():
        acc_a[...] = jnp.zeros_like(acc_a)
        acc_c[...] = jnp.zeros_like(acc_c)
        acc_j[...] = jnp.zeros_like(acc_j)

    # Activations cast to bf16 for the MXU (weights arrive pre-cast);
    # accumulate in f32 across K tiles.
    xa = xa_ref[...].astype(jnp.bfloat16)   # [tm, tk]
    xc = xc_ref[...].astype(jnp.bfloat16)   # [tm, tk]

    acc_a[...] += jnp.dot(xa, wa_ref[...], preferred_element_type=jnp.float32)
    acc_c[...] += jnp.dot(xc, wc_ref[...], preferred_element_type=jnp.float32)
    # Joint encoder on the implicit concat [xa | xc]: split-K accumulation,
    # the concatenated input is never materialized.
    acc_j[...] += (jnp.dot(xa, wja_ref[...], preferred_element_type=jnp.float32)
                   + jnp.dot(xc, wjb_ref[...], preferred_element_type=jnp.float32))

    @pl.when(k == pl.num_programs(1) - 1)
    def _():
        tm = acc_a.shape[0]
        ba = bias_ref[0:1, :]
        bc = bias_ref[1:2, :]
        bj = bias_ref[2:3, :]
        bp = bias_ref[3:4, :]

        # Bias + ReLU in f32; write bf16 hiddens directly into the stacked
        # scratch (no f32 concat, no whole-slab astype copy).
        h_scr[0:tm, :] = jnp.maximum(acc_a[...] + ba, 0.0).astype(jnp.bfloat16)
        h_scr[tm:2 * tm, :] = jnp.maximum(acc_c[...] + bc, 0.0).astype(jnp.bfloat16)
        h_scr[2 * tm:3 * tm, :] = jnp.maximum(acc_j[...] + bj, 0.0).astype(jnp.bfloat16)

        # Shared projector applied ONCE to the stacked [3*tm, H] bf16 slab.
        y = jnp.dot(h_scr[...], wp_ref[...],
                    preferred_element_type=jnp.float32) + bp

        # Row-wise L2 normalization (single rsqrt on the EUP).
        sumsq = jnp.sum(y * y, axis=-1, keepdims=True)
        yn = y * lax.rsqrt(sumsq + _EPS)

        oa_ref[...] = yn[0:tm, :]
        oc_ref[...] = yn[tm:2 * tm, :]
        oj_ref[...] = yn[2 * tm:3 * tm, :]


# ----------------------------------------------------------------------------
# Wrapper: tile selection + pallas_call
# ----------------------------------------------------------------------------
def gmc_fused_call(xa, xc, params, *, tm=None, tk=None):
    """xa, xc: [B, K] f32 flattened per-modality inputs.
    Returns (audio, acc, joint) latents, each [Mp, H] f32 (rows >= B padded)."""
    B, K = xa.shape
    kp = params["kernel"]
    H = kp["wp"].shape[1]

    # tm: multiple of 16 (bf16 packs 16 sublanes/vreg) so the per-branch
    # hiddens and the 3*tm stacked projector operand sit on full (16,128)
    # bf16 tiles; capped at 256 to fill the 256-wide v6e/v7x MXU without
    # ballooning VMEM (v5e's MXU is 128-wide, also fine).
    if tm is None:
        tm = min(_round_up(max(B, 16), 16), 256)
    Mp = _round_up(B, tm)

    # tk: K-depth per grid step.  At these sizes 256 keeps the double-buffered
    # bf16 weight tiles + f32 activation tiles far below the 32 MiB budget
    # requested below; for realistic K raise toward ~2048 (re-derive for
    # v7x's 64 MiB physical VMEM vs 128 MiB on v5e/v6e).
    if tk is None:
        tk = 256 if K % 256 == 0 else K
    assert K % tk == 0, "TODO(synk): pad/mask a ragged K tile for arbitrary feature dims"

    # TODO(synk): at scale, drop this wrapper-side pad and mask the ragged
    # last M tile in-kernel instead (saves one HBM read+write of xa/xc).
    def pad_rows(x):
        return jnp.pad(x, ((0, Mp - B), (0, 0))) if Mp != B else x
    xa_p, xc_p = pad_rows(xa), pad_rows(xc)

    n_m, n_k = Mp // tm, K // tk

    grid_spec = pltpu.PrefetchScalarGridSpec(
        num_scalar_prefetch=0,
        grid=(n_m, n_k),
        in_specs=[
            pl.BlockSpec((tm, tk), lambda i, k: (i, k)),   # xa (f32)
            pl.BlockSpec((tm, tk), lambda i, k: (i, k)),   # xc (f32)
            pl.BlockSpec((tk, H), lambda i, k: (k, 0)),    # wa  (bf16)
            pl.BlockSpec((tk, H), lambda i, k: (k, 0)),    # wc  (bf16)
            pl.BlockSpec((tk, H), lambda i, k: (k, 0)),    # wja (bf16, joint K-split)
            pl.BlockSpec((tk, H), lambda i, k: (k, 0)),    # wjb (bf16, joint K-split)
            pl.BlockSpec((8, H), lambda i, k: (0, 0)),     # packed biases (f32)
            pl.BlockSpec((H, H), lambda i, k: (0, 0)),     # wp (bf16)
        ],
        out_specs=[
            pl.BlockSpec((tm, H), lambda i, k: (i, 0)),    # audio latents
            pl.BlockSpec((tm, H), lambda i, k: (i, 0)),    # acc latents
            pl.BlockSpec((tm, H), lambda i, k: (i, 0)),    # joint latents
        ],
        scratch_shapes=[
            pltpu.VMEM((tm, H), jnp.float32),              # acc_a
            pltpu.VMEM((tm, H), jnp.float32),              # acc_c
            pltpu.VMEM((tm, H), jnp.float32),              # acc_j
            pltpu.VMEM((3 * tm, H), jnp.bfloat16),         # stacked projector input
        ],
    )

    flops = 2 * 2 * Mp * K * H           # audio + acc encoders
    flops += 2 * Mp * (2 * K) * H        # joint encoder (two split-K dots)
    flops += 2 * (3 * Mp) * H * H        # shared projector
    w_bytes = sum(int(kp[n].size) * kp[n].dtype.itemsize
                  for n in ("wa", "wc", "wja", "wjb", "wp"))
    bytes_accessed = (int(xa_p.size) + int(xc_p.size)) * 4
    bytes_accessed += w_bytes * n_m + int(kp["bias"].size) * 4
    bytes_accessed += 3 * Mp * H * 4

    return pl.pallas_call(
        _gmc_kernel,
        out_shape=(
            jax.ShapeDtypeStruct((Mp, H), jnp.float32),
            jax.ShapeDtypeStruct((Mp, H), jnp.float32),
            jax.ShapeDtypeStruct((Mp, H), jnp.float32),
        ),
        grid_spec=grid_spec,
        compiler_params=pltpu.CompilerParams(
            # Batch tiles shard across v7x's two TensorCores; K reduction is
            # sequential (accumulator pattern).
            dimension_semantics=("parallel", "arbitrary"),
            # Explicit budget: above v5e's 16 MiB scoped default, equal to
            # the v6e/v7x scoped default, well under v7x's 64 MiB physical.
            vmem_limit_bytes=32 * 1024 * 1024,
        ),
        cost_estimate=pl.CostEstimate(
            flops=flops, transcendentals=3 * Mp, bytes_accessed=bytes_accessed),
    )(xa_p, xc_p, kp["wa"], kp["wc"], kp["wja"], kp["wjb"],
      kp["bias"], kp["wp"])


# ----------------------------------------------------------------------------
# Backbone parameters (deterministic, minimal)
# ----------------------------------------------------------------------------
def init_params(key, per_mod_in_dim, joint_in_dim, hidden=HIDDEN_DIM):
    params = {"mod_enc": {}}
    keys = jax.random.split(key, 2 * len(MODALITIES) + 4)
    ki = 0
    for mod in MODALITIES:
        w = jax.random.normal(keys[ki], (per_mod_in_dim, hidden), jnp.float32)
        w = w * (1.0 / jnp.sqrt(per_mod_in_dim))
        b = jax.random.normal(keys[ki + 1], (1, hidden), jnp.float32) * 0.01
        params["mod_enc"][mod] = (w, b)
        ki += 2
    wj = jax.random.normal(keys[ki], (joint_in_dim, hidden), jnp.float32)
    wj = wj * (1.0 / jnp.sqrt(joint_in_dim))
    bj = jax.random.normal(keys[ki + 1], (1, hidden), jnp.float32) * 0.01
    params["joint_enc"] = (wj, bj)
    wp = jax.random.normal(keys[ki + 2], (hidden, hidden), jnp.float32)
    wp = wp * (1.0 / jnp.sqrt(hidden))
    bp = jax.random.normal(keys[ki + 3], (1, hidden), jnp.float32) * 0.01
    params["proj"] = (wp, bp)

    # Kernel-side bundle, built ONCE at init (not per forward call):
    #   * matmul weights pre-cast to bf16 (no per-call convert ops, half the
    #     weight HBM traffic),
    #   * joint weight pre-split along K into its audio / acc blocks,
    #   * the four (1, hidden) biases packed into one (8, hidden) f32 array
    #     (rows 4..7 are zero padding for (8,128) alignment) -> one DMA
    #     descriptor instead of four tiny ones.
    wa, ba = params["mod_enc"]["audio"]
    wc, bc = params["mod_enc"]["acc"]
    K = per_mod_in_dim
    bias_pack = jnp.concatenate(
        [ba, bc, bj, bp, jnp.zeros((4, hidden), jnp.float32)], axis=0)
    params["kernel"] = {
        "wa": wa.astype(jnp.bfloat16),
        "wc": wc.astype(jnp.bfloat16),
        "wja": wj[:K].astype(jnp.bfloat16),
        "wjb": wj[K:].astype(jnp.bfloat16),
        "wp": wp.astype(jnp.bfloat16),
        "bias": bias_pack,                 # (8, hidden) f32
    }
    return params


# ----------------------------------------------------------------------------
# GMC forward (backbone with class_head=False semantics)
# ----------------------------------------------------------------------------
def gmc_forward(freq_input, params, *, tm=None, tk=None):
    """
    freq_input[loc][mod]: [B, C, H, W] float32 (NCHW, matching PyTorch).
    Returns {mod: fm for mod in modalities} U {"joint": f1M},
    each [B, HIDDEN_DIM], L2-normalized along the last axis.
    """
    # Glue: flatten NCHW per modality, concatenating over locations.
    # Inputs stay f32 here; if the upstream producer can emit bf16 directly,
    # pass bf16 activations through (the kernel accumulates in f32 either
    # way).  Do NOT add a standalone wrapper-side convert just for this.
    flat = {}
    for mod in MODALITIES:
        flat[mod] = jnp.concatenate(
            [freq_input[loc][mod].reshape(freq_input[loc][mod].shape[0], -1)
             for loc in LOCATIONS], axis=-1)
    B = flat[MODALITIES[0]].shape[0]

    out_a, out_c, out_j = gmc_fused_call(
        flat["audio"], flat["acc"], params, tm=tm, tk=tk)

    # Static leading slices only (padded rows dropped).
    return {"audio": out_a[:B], "acc": out_c[:B], "joint": out_j[:B]}


# ----------------------------------------------------------------------------
# Main
# ----------------------------------------------------------------------------
if __name__ == "__main__":
    key = jax.random.PRNGKey(0)

    B, C, H, W = 2, 4, 8, 8  # small NCHW spectrogram-like inputs
    per_mod_in_dim = len(LOCATIONS) * C * H * W        # 2*4*8*8 = 512
    joint_in_dim = len(MODALITIES) * per_mod_in_dim     # 1024

    # Deterministic example inputs freq_input[loc][mod].
    key, *input_keys = jax.random.split(key, 1 + len(LOCATIONS) * len(MODALITIES))
    freq_input = {}
    ki = 0
    for loc in LOCATIONS:
        freq_input[loc] = {}
        for mod in MODALITIES:
            freq_input[loc][mod] = jax.random.normal(
                input_keys[ki], (B, C, H, W), jnp.float32)
            ki += 1

    key, pkey = jax.random.split(key)
    params = init_params(pkey, per_mod_in_dim, joint_in_dim)

    # tk=256 -> K grid of 2, exercising the init/accumulate/epilogue path.
    feats = gmc_forward(freq_input, params, tk=256)
    feats = jax.tree_util.tree_map(jax.block_until_ready, feats)

    # Basic sanity: expected keys, shapes, unit-norm latents.
    expected_keys = set(MODALITIES) | {"joint"}
    assert set(feats.keys()) == expected_keys
    for k, v in feats.items():
        assert v.shape == (B, HIDDEN_DIM), (k, v.shape)
        norms = jnp.linalg.norm(v, axis=-1)
        assert bool(jnp.all(jnp.abs(norms - 1.0) < 1e-3)), (k, norms)

    # Cross-check against a pure-JAX reference (bf16 matmul / f32 accumulate).
    def ref_forward():
        xa = jnp.concatenate(
            [freq_input[l]["audio"].reshape(B, -1) for l in LOCATIONS], axis=-1)
        xc = jnp.concatenate(
            [freq_input[l]["acc"].reshape(B, -1) for l in LOCATIONS], axis=-1)
        wa, ba = params["mod_enc"]["audio"]
        wc, bc = params["mod_enc"]["acc"]
        wj, bj = params["joint_enc"]
        wp, bp = params["proj"]

        def mm(x, w):
            return jnp.dot(x.astype(jnp.bfloat16), w.astype(jnp.bfloat16),
                           preferred_element_type=jnp.float32)

        ha = jnp.maximum(mm(xa, wa) + ba, 0.0)
        hc = jnp.maximum(mm(xc, wc) + bc, 0.0)
        hj = jnp.maximum(mm(jnp.concatenate([xa, xc], -1), wj) + bj, 0.0)

        def proj(h):
            y = mm(h, wp) + bp
            return y / jnp.sqrt(jnp.sum(y * y, -1, keepdims=True) + _EPS)

        return {"audio": proj(ha), "acc": proj(hc), "joint": proj(hj)}

    ref = ref_forward()
    for k in expected_keys:
        assert bool(jnp.max(jnp.abs(feats[k] - ref[k])) < 2e-2), k

    print("KERNEL_OK")
</pallas_src>

<mosaic_0001>
module attributes {stable_mosaic.version = 11 : i64} {
  func.func @_gmc_kernel(%arg0: i32, %arg1: i32, %arg2: memref<16x256xf32, #tpu.memory_space<vmem>>, %arg3: memref<16x256xf32, #tpu.memory_space<vmem>>, %arg4: memref<256x128xbf16, #tpu.memory_space<vmem>>, %arg5: memref<256x128xbf16, #tpu.memory_space<vmem>>, %arg6: memref<256x128xbf16, #tpu.memory_space<vmem>>, %arg7: memref<256x128xbf16, #tpu.memory_space<vmem>>, %arg8: memref<8x128xf32, #tpu.memory_space<vmem>>, %arg9: memref<128x128xbf16, #tpu.memory_space<vmem>>, %arg10: memref<16x128xf32, #tpu.memory_space<vmem>>, %arg11: memref<16x128xf32, #tpu.memory_space<vmem>>, %arg12: memref<16x128xf32, #tpu.memory_space<vmem>>, %arg13: memref<16x128xf32, #tpu.memory_space<vmem>>, %arg14: memref<16x128xf32, #tpu.memory_space<vmem>>, %arg15: memref<16x128xf32, #tpu.memory_space<vmem>>, %arg16: memref<48x128xbf16, #tpu.memory_space<vmem>>) attributes {dimension_semantics = [#tpu.dimension_semantics<parallel>, #tpu.dimension_semantics<arbitrary>], iteration_bounds = array<i64: 1, 2>, scalar_prefetch = 0 : i64, scratch_operands = 4 : i64, tpu.core_type = #tpu.core_type<tc>, window_params = [{transform_indices = @transform_0, window_bounds = array<i64: 16, 256>}, {transform_indices = @transform_1, window_bounds = array<i64: 16, 256>}, {transform_indices = @transform_2, window_bounds = array<i64: 256, 128>}, {transform_indices = @transform_3, window_bounds = array<i64: 256, 128>}, {transform_indices = @transform_4, window_bounds = array<i64: 256, 128>}, {transform_indices = @transform_5, window_bounds = array<i64: 256, 128>}, {pipeline_mode = #tpu.pipeline_mode<synchronous>, transform_indices = @transform_6, window_bounds = array<i64: 8, 128>}, {pipeline_mode = #tpu.pipeline_mode<synchronous>, transform_indices = @transform_7, window_bounds = array<i64: 128, 128>}, {transform_indices = @transform_8, window_bounds = array<i64: 16, 128>}, {transform_indices = @transform_9, window_bounds = array<i64: 16, 128>}, {transform_indices = @transform_10, window_bounds = array<i64: 16, 128>}]} {
    %c0_i32 = arith.constant 0 : i32
    %0 = arith.cmpi eq, %arg1, %c0_i32 : i32
    %1 = arith.extui %0 : i1 to i32
    %c0_i32_0 = arith.constant 0 : i32
    %2 = arith.cmpi ne, %1, %c0_i32_0 : i32
    scf.if %2 {
      %cst_28 = arith.constant 0.000000e+00 : f32
      %28 = vector.broadcast %cst_28 : f32 to vector<16x128xf32>
      %c0_29 = arith.constant 0 : index
      %c0_30 = arith.constant 0 : index
      %29 = vector.load %arg13[%c0_29, %c0_30] : memref<16x128xf32, #tpu.memory_space<vmem>>, vector<16x128xf32>
      tpu.vector_store %arg13[%c0_29, %c0_30], %28 {strides = array<i32>} : memref<16x128xf32, #tpu.memory_space<vmem>>, vector<16x128xf32>,
      %cst_31 = arith.constant 0.000000e+00 : f32
      %30 = vector.broadcast %cst_31 : f32 to vector<16x128xf32>
      %c0_32 = arith.constant 0 : index
      %c0_33 = arith.constant 0 : index
      %31 = vector.load %arg14[%c0_32, %c0_33] : memref<16x128xf32, #tpu.memory_space<vmem>>, vector<16x128xf32>
      tpu.vector_store %arg14[%c0_32, %c0_33], %30 {strides = array<i32>} : memref<16x128xf32, #tpu.memory_space<vmem>>, vector<16x128xf32>,
      %cst_34 = arith.constant 0.000000e+00 : f32
      %32 = vector.broadcast %cst_34 : f32 to vector<16x128xf32>
      %c0_35 = arith.constant 0 : index
      %c0_36 = arith.constant 0 : index
      %33 = vector.load %arg15[%c0_35, %c0_36] : memref<16x128xf32, #tpu.memory_space<vmem>>, vector<16x128xf32>
      tpu.vector_store %arg15[%c0_35, %c0_36], %32 {strides = array<i32>} : memref<16x128xf32, #tpu.memory_space<vmem>>, vector<16x128xf32>,
    } else {
    }
    %c0 = arith.constant 0 : index
    %c0_1 = arith.constant 0 : index
    %3 = vector.load %arg2[%c0, %c0_1] : memref<16x256xf32, #tpu.memory_space<vmem>>, vector<16x256xf32>
    %4 = arith.truncf %3 : vector<16x256xf32> to vector<16x256xbf16>
    %c0_2 = arith.constant 0 : index
    %c0_3 = arith.constant 0 : index
    %5 = vector.load %arg3[%c0_2, %c0_3] : memref<16x256xf32, #tpu.memory_space<vmem>>, vector<16x256xf32>
    %6 = arith.truncf %5 : vector<16x256xf32> to vector<16x256xbf16>
    %c0_4 = arith.constant 0 : index
    %c0_5 = arith.constant 0 : index
    %7 = vector.load %arg13[%c0_4, %c0_5] : memref<16x128xf32, #tpu.memory_space<vmem>>, vector<16x128xf32>
    %c0_6 = arith.constant 0 : index
    %c0_7 = arith.constant 0 : index
    %8 = vector.load %arg4[%c0_6, %c0_7] : memref<256x128xbf16, #tpu.memory_space<vmem>>, vector<256x128xbf16>
    %cst = arith.constant dense<0.000000e+00> : vector<16x128xf32>
    %9 = tpu.matmul %4, %8, %cst {dimension_numbers = #tpu.dot_dimension_numbers<[1], [0], [0], [1], [0, 0, 1, 1], [], []>} : vector<16x256xbf16>, vector<256x128xbf16>, vector<16x128xf32> -> vector<16x128xf32>
    %10 = arith.addf %7, %9 : vector<16x128xf32>
    %c0_8 = arith.constant 0 : index
    %c0_9 = arith.constant 0 : index
    %11 = vector.load %arg13[%c0_8, %c0_9] : memref<16x128xf32, #tpu.memory_space<vmem>>, vector<16x128xf32>
    tpu.vector_store %arg13[%c0_8, %c0_9], %10 {strides = array<i32>} : memref<16x128xf32, #tpu.memory_space<vmem>>, vector<16x128xf32>,
    %c0_10 = arith.constant 0 : index
    %c0_11 = arith.constant 0 : index
    %12 = vector.load %arg14[%c0_10, %c0_11] : memref<16x128xf32, #tpu.memory_space<vmem>>, vector<16x128xf32>
    %c0_12 = arith.constant 0 : index
    %c0_13 = arith.constant 0 : index
    %13 = vector.load %arg5[%c0_12, %c0_13] : memref<256x128xbf16, #tpu.memory_space<vmem>>, vector<256x128xbf16>
    %cst_14 = arith.constant dense<0.000000e+00> : vector<16x128xf32>
    %14 = tpu.matmul %6, %13, %cst_14 {dimension_numbers = #tpu.dot_dimension_numbers<[1], [0], [0], [1], [0, 0, 1, 1], [], []>} : vector<16x256xbf16>, vector<256x128xbf16>, vector<16x128xf32> -> vector<16x128xf32>
    %15 = arith.addf %12, %14 : vector<16x128xf32>
    %c0_15 = arith.constant 0 : index
    %c0_16 = arith.constant 0 : index
    %16 = vector.load %arg14[%c0_15, %c0_16] : memref<16x128xf32, #tpu.memory_space<vmem>>, vector<16x128xf32>
    tpu.vector_store %arg14[%c0_15, %c0_16], %15 {strides = array<i32>} : memref<16x128xf32, #tpu.memory_space<vmem>>, vector<16x128xf32>,
    %c0_17 = arith.constant 0 : index
    %c0_18 = arith.constant 0 : index
    %17 = vector.load %arg15[%c0_17, %c0_18] : memref<16x128xf32, #tpu.memory_space<vmem>>, vector<16x128xf32>
    %c0_19 = arith.constant 0 : index
    %c0_20 = arith.constant 0 : index
    %18 = vector.load %arg6[%c0_19, %c0_20] : memref<256x128xbf16, #tpu.memory_space<vmem>>, vector<256x128xbf16>
    %cst_21 = arith.constant dense<0.000000e+00> : vector<16x128xf32>
    %19 = tpu.matmul %4, %18, %cst_21 {dimension_numbers = #tpu.dot_dimension_numbers<[1], [0], [0], [1], [0, 0, 1, 1], [], []>} : vector<16x256xbf16>, vector<256x128xbf16>, vector<16x128xf32> -> vector<16x128xf32>
    %c0_22 = arith.constant 0 : index
    %c0_23 = arith.constant 0 : index
    %20 = vector.load %arg7[%c0_22, %c0_23] : memref<256x128xbf16, #tpu.memory_space<vmem>>, vector<256x128xbf16>
    %cst_24 = arith.constant dense<0.000000e+00> : vector<16x128xf32>
    %21 = tpu.matmul %6, %20, %cst_24 {dimension_numbers = #tpu.dot_dimension_numbers<[1], [0], [0], [1], [0, 0, 1, 1], [], []>} : vector<16x256xbf16>, vector<256x128xbf16>, vector<16x128xf32> -> vector<16x128xf32>
    %22 = arith.addf %19, %21 : vector<16x128xf32>
    %23 = arith.addf %17, %22 : vector<16x128xf32>
    %c0_25 = arith.constant 0 : index
    %c0_26 = arith.constant 0 : index
    %24 = vector.load %arg15[%c0_25, %c0_26] : memref<16x128xf32, #tpu.memory_space<vmem>>, vector<16x128xf32>
    tpu.vector_store %arg15[%c0_25, %c0_26], %23 {strides = array<i32>} : memref<16x128xf32, #tpu.memory_space<vmem>>, vector<16x128xf32>,
    %c1_i32 = arith.constant 1 : i32
    %25 = arith.cmpi eq, %arg1, %c1_i32 : i32
    %26 = arith.extui %25 : i1 to i32
    %c0_i32_27 = arith.constant 0 : i32
    %27 = arith.cmpi ne, %26, %c0_i32_27 : i32
    scf.if %27 {
      %c0_28 = arith.constant 0 : index
      %c0_29 = arith.constant 0 : index
      %28 = vector.load %arg8[%c0_28, %c0_29] : memref<8x128xf32, #tpu.memory_space<vmem>>, vector<1x128xf32>
      %c1 = arith.constant 1 : index
      %c0_30 = arith.constant 0 : index
      %29 = vector.load %arg8[%c1, %c0_30] : memref<8x128xf32, #tpu.memory_space<vmem>>, vector<1x128xf32>
      %c2 = arith.constant 2 : index
      %c0_31 = arith.constant 0 : index
      %30 = vector.load %arg8[%c2, %c0_31] : memref<8x128xf32, #tpu.memory_space<vmem>>, vector<1x128xf32>
      %c3 = arith.constant 3 : index
      %c0_32 = arith.constant 0 : index
      %31 = vector.load %arg8[%c3, %c0_32] : memref<8x128xf32, #tpu.memory_space<vmem>>, vector<1x128xf32>
      %c0_33 = arith.constant 0 : index
      %c0_34 = arith.constant 0 : index
      %32 = vector.load %arg13[%c0_33, %c0_34] : memref<16x128xf32, #tpu.memory_space<vmem>>, vector<16x128xf32>
      %33 = vector.broadcast %28 : vector<1x128xf32> to vector<16x128xf32>
      %34 = arith.addf %32, %33 : vector<16x128xf32>
      %cst_35 = arith.constant 0.000000e+00 : f32
      %35 = vector.broadcast %cst_35 : f32 to vector<16x128xf32>
      %36 = arith.maximumf %34, %35 : vector<16x128xf32>
      %37 = arith.truncf %36 : vector<16x128xf32> to vector<16x128xbf16>
      %c0_36 = arith.constant 0 : index
      %c0_37 = arith.constant 0 : index
      %38 = vector.load %arg16[%c0_36, %c0_37] : memref<48x128xbf16, #tpu.memory_space<vmem>>, vector<16x128xbf16>
      tpu.vector_store %arg16[%c0_36, %c0_37], %37 {strides = array<i32>} : memref<48x128xbf16, #tpu.memory_space<vmem>>, vector<16x128xbf16>,
      %c0_38 = arith.constant 0 : index
      %c0_39 = arith.constant 0 : index
      %39 = vector.load %arg14[%c0_38, %c0_39] : memref<16x128xf32, #tpu.memory_space<vmem>>, vector<16x128xf32>
      %40 = vector.broadcast %29 : vector<1x128xf32> to vector<16x128xf32>
      %41 = arith.addf %39, %40 : vector<16x128xf32>
      %cst_40 = arith.constant 0.000000e+00 : f32
      %42 = vector.broadcast %cst_40 : f32 to vector<16x128xf32>
      %43 = arith.maximumf %41, %42 : vector<16x128xf32>
      %44 = arith.truncf %43 : vector<16x128xf32> to vector<16x128xbf16>
      %c16 = arith.constant 16 : index
      %c0_41 = arith.constant 0 : index
      %45 = vector.load %arg16[%c16, %c0_41] : memref<48x128xbf16, #tpu.memory_space<vmem>>, vector<16x128xbf16>
      tpu.vector_store %arg16[%c16, %c0_41], %44 {strides = array<i32>} : memref<48x128xbf16, #tpu.memory_space<vmem>>, vector<16x128xbf16>,
      %c0_42 = arith.constant 0 : index
      %c0_43 = arith.constant 0 : index
      %46 = vector.load %arg15[%c0_42, %c0_43] : memref<16x128xf32, #tpu.memory_space<vmem>>, vector<16x128xf32>
      %47 = vector.broadcast %30 : vector<1x128xf32> to vector<16x128xf32>
      %48 = arith.addf %46, %47 : vector<16x128xf32>
      %cst_44 = arith.constant 0.000000e+00 : f32
      %49 = vector.broadcast %cst_44 : f32 to vector<16x128xf32>
      %50 = arith.maximumf %48, %49 : vector<16x128xf32>
      %51 = arith.truncf %50 : vector<16x128xf32> to vector<16x128xbf16>
      %c32 = arith.constant 32 : index
      %c0_45 = arith.constant 0 : index
      %52 = vector.load %arg16[%c32, %c0_45] : memref<48x128xbf16, #tpu.memory_space<vmem>>, vector<16x128xbf16>
      tpu.vector_store %arg16[%c32, %c0_45], %51 {strides = array<i32>} : memref<48x128xbf16, #tpu.memory_space<vmem>>, vector<16x128xbf16>,
      %c0_46 = arith.constant 0 : index
      %c0_47 = arith.constant 0 : index
      %53 = vector.load %arg16[%c0_46, %c0_47] : memref<48x128xbf16, #tpu.memory_space<vmem>>, vector<48x128xbf16>
      %c0_48 = arith.constant 0 : index
      %c0_49 = arith.constant 0 : index
      %54 = vector.load %arg9[%c0_48, %c0_49] : memref<128x128xbf16, #tpu.memory_space<vmem>>, vector<128x128xbf16>
      %cst_50 = arith.constant dense<0.000000e+00> : vector<48x128xf32>
      %55 = tpu.matmul %53, %54, %cst_50 {dimension_numbers = #tpu.dot_dimension_numbers<[1], [0], [0], [1], [0, 0, 1, 1], [], []>} : vector<48x128xbf16>, vector<128x128xbf16>, vector<48x128xf32> -> vector<48x128xf32>
      %56 = vector.broadcast %31 : vector<1x128xf32> to vector<48x128xf32>
      %57 = arith.addf %55, %56 : vector<48x128xf32>
      %58 = arith.mulf %57, %57 : vector<48x128xf32>
      %cst_51 = arith.constant dense<0.000000e+00> : vector<48xf32>
      %59 = vector.multi_reduction <add>, %58, %cst_51 [1] : vector<48x128xf32> to vector<48xf32>
      %60 = vector.shape_cast %59 : vector<48xf32> to vector<48x1xf32>
      %cst_52 = arith.constant 9.99999996E-13 : f32
      %61 = vector.broadcast %cst_52 : f32 to vector<48x1xf32>
      %62 = arith.addf %60, %61 : vector<48x1xf32>
      %63 = math.rsqrt %62 : vector<48x1xf32>
      %64 = vector.broadcast %63 : vector<48x1xf32> to vector<48x128xf32>
      %65 = arith.mulf %57, %64 : vector<48x128xf32>
      %66 = vector.extract_strided_slice %65 {offsets = [0, 0], sizes = [16, 128], strides = [1, 1]} : vector<48x128xf32> to vector<16x128xf32>
      %c0_53 = arith.constant 0 : index
      %c0_54 = arith.constant 0 : index
      %67 = vector.load %arg10[%c0_53, %c0_54] : memref<16x128xf32, #tpu.memory_space<vmem>>, vector<16x128xf32>
      tpu.vector_store %arg10[%c0_53, %c0_54], %66 {strides = array<i32>} : memref<16x128xf32, #tpu.memory_space<vmem>>, vector<16x128xf32>,
      %68 = vector.extract_strided_slice %65 {offsets = [16, 0], sizes = [16, 128], strides = [1, 1]} : vector<48x128xf32> to vector<16x128xf32>
      %c0_55 = arith.constant 0 : index
      %c0_56 = arith.constant 0 : index
      %69 = vector.load %arg11[%c0_55, %c0_56] : memref<16x128xf32, #tpu.memory_space<vmem>>, vector<16x128xf32>
      tpu.vector_store %arg11[%c0_55, %c0_56], %68 {strides = array<i32>} : memref<16x128xf32, #tpu.memory_space<vmem>>, vector<16x128xf32>,
      %70 = vector.extract_strided_slice %65 {offsets = [32, 0], sizes = [16, 128], strides = [1, 1]} : vector<48x128xf32> to vector<16x128xf32>
      %c0_57 = arith.constant 0 : index
      %c0_58 = arith.constant 0 : index
      %71 = vector.load %arg12[%c0_57, %c0_58] : memref<16x128xf32, #tpu.memory_space<vmem>>, vector<16x128xf32>
      tpu.vector_store %arg12[%c0_57, %c0_58], %70 {strides = array<i32>} : memref<16x128xf32, #tpu.memory_space<vmem>>, vector<16x128xf32>,
    } else {
    }
    return
  }
  func.func @transform_0(%arg0: i32, %arg1: i32) -> (i32, i32) {
    %c0_i32 = arith.constant 0 : i32
    return %arg0, %arg1 : i32, i32
  }
  func.func @transform_1(%arg0: i32, %arg1: i32) -> (i32, i32) {
    %c0_i32 = arith.constant 0 : i32
    return %arg0, %arg1 : i32, i32
  }
  func.func @transform_2(%arg0: i32, %arg1: i32) -> (i32, i32) {
    %c0_i32 = arith.constant 0 : i32
    %c0_i32_0 = arith.constant 0 : i32
    return %arg1, %c0_i32 : i32, i32
  }
  func.func @transform_3(%arg0: i32, %arg1: i32) -> (i32, i32) {
    %c0_i32 = arith.constant 0 : i32
    %c0_i32_0 = arith.constant 0 : i32
    return %arg1, %c0_i32 : i32, i32
  }
  func.func @transform_4(%arg0: i32, %arg1: i32) -> (i32, i32) {
    %c0_i32 = arith.constant 0 : i32
    %c0_i32_0 = arith.constant 0 : i32
    return %arg1, %c0_i32 : i32, i32
  }
  func.func @transform_5(%arg0: i32, %arg1: i32) -> (i32, i32) {
    %c0_i32 = arith.constant 0 : i32
    %c0_i32_0 = arith.constant 0 : i32
    return %arg1, %c0_i32 : i32, i32
  }
  func.func @transform_6(%arg0: i32, %arg1: i32) -> (i32, i32) {
    %c0_i32 = arith.constant 0 : i32
    %c0_i32_0 = arith.constant 0 : i32
    %c0_i32_1 = arith.constant 0 : i32
    return %c0_i32, %c0_i32_0 : i32, i32
  }
  func.func @transform_7(%arg0: i32, %arg1: i32) -> (i32, i32) {
    %c0_i32 = arith.constant 0 : i32
    %c0_i32_0 = arith.constant 0 : i32
    %c0_i32_1 = arith.constant 0 : i32
    return %c0_i32, %c0_i32_0 : i32, i32
  }
  func.func @transform_8(%arg0: i32, %arg1: i32) -> (i32, i32) {
    %c0_i32 = arith.constant 0 : i32
    %c0_i32_0 = arith.constant 0 : i32
    return %arg0, %c0_i32 : i32, i32
  }
  func.func @transform_9(%arg0: i32, %arg1: i32) -> (i32, i32) {
    %c0_i32 = arith.constant 0 : i32
    %c0_i32_0 = arith.constant 0 : i32
    return %arg0, %c0_i32 : i32, i32
  }
  func.func @transform_10(%arg0: i32, %arg1: i32) -> (i32, i32) {
    %c0_i32 = arith.constant 0 : i32
    %c0_i32_0 = arith.constant 0 : i32
    return %arg0, %c0_i32 : i32, i32
  }
}

</mosaic_0001>

<llo_original>
// kernel: tpu_custom_call.1
$region0: #{tpu_custom_call.1}
  #allocation0 [shape = 'u32[]', space=smem, size = 0x4, offset = 0x4, fixed_abs, tag = 'smem constant byte address 0x4 - core index']
  #allocation1 [shape = 'u32[72,128]{1,0:T(1,128)}', space=vmem, size = 0x9000, scoped, tag = 'internal scratch']
  #allocation2 [shape = 'f32[16,128]{1,0:T(8,128)}', space=vmem, size = 0x2000, scoped, tag = 'scratch operand']
  #allocation3 [shape = 'f32[16,128]{1,0:T(8,128)}', space=vmem, size = 0x2000, scoped, tag = 'scratch operand']
  #allocation4 [shape = 'f32[16,128]{1,0:T(8,128)}', space=vmem, size = 0x2000, scoped, tag = 'scratch operand']
  #allocation5 [shape = 'bf16[48,128]{1,0:T(8,128)(2,1)}', space=vmem, size = 0x3000, scoped, tag = 'scratch operand']
  %s0 = inlined_call_operand.hbm [shape: f32[16,512], index: 0, kind: input, shape index: {}]
  %s1 = inlined_call_operand.hbm [shape: f32[16,512], index: 1, kind: input, shape index: {}]
  %s2 = inlined_call_operand.hbm [shape: bf16[512,128], index: 2, kind: input, shape index: {}]
  %s3 = inlined_call_operand.hbm [shape: bf16[512,128], index: 3, kind: input, shape index: {}]
  %s4 = inlined_call_operand.hbm [shape: bf16[512,128], index: 4, kind: input, shape index: {}]
  %s5 = inlined_call_operand.hbm [shape: bf16[512,128], index: 5, kind: input, shape index: {}]
  %s6 = inlined_call_operand.hbm [shape: f32[8,128], index: 6, kind: input, shape index: {}]
  %s7 = inlined_call_operand.hbm [shape: bf16[128,128], index: 7, kind: input, shape index: {}]
  %s8 = inlined_call_operand.hbm [shape: f32[16,128], index: 8, kind: output, shape index: {0}]
  %s9 = inlined_call_operand.hbm [shape: f32[16,128], index: 9, kind: output, shape index: {1}]
  %s10 = inlined_call_operand.hbm [shape: f32[16,128], index: 10, kind: output, shape index: {2}]
  %11 = xla_tuple %s8, %s9, %s10
  %s12 = sld [smem:[#allocation0]]
  $region121: #{tpu_custom_call.1} parent=0
    _
  %s14 = ssub.s32 1, %s12
  %s15 = scalar_select 0, %s14, %s12
  $region1: #{tpu_custom_call.1} parent=0
    #allocation6 [shape = 'u8[32768]{0}', space=vmem, size = 0x8000, scoped, tag = 'input window, operand 0']
    #allocation7 [shape = 's32[2]{0}', space=sflag, size = 0x8, scoped, tag = 'scoped memory for tpu_custom_call.1']
    #allocation8 [shape = 's32[2]{0}', space=sflag, size = 0x8, scoped, tag = 'scoped memory for tpu_custom_call.1']
    #allocation9 [shape = 'u8[32768]{0}', space=vmem, size = 0x8000, scoped, tag = 'input window, operand 1']
    #allocation10 [shape = 's32[2]{0}', space=sflag, size = 0x8, scoped, tag = 'scoped memory for tpu_custom_call.1']
    #allocation11 [shape = 'u8[131072]{0}', space=vmem, size = 0x20000, scoped, tag = 'input window, operand 2']
    #allocation12 [shape = 'u8[131072]{0}', space=vmem, size = 0x20000, scoped, tag = 'input window, operand 3']
    #allocation13 [shape = 's32[2]{0}', space=sflag, size = 0x8, scoped, tag = 'scoped memory for tpu_custom_call.1']
    #allocation14 [shape = 'u8[131072]{0}', space=vmem, size = 0x20000, scoped, tag = 'input window, operand 4']
    #allocation15 [shape = 'u8[131072]{0}', space=vmem, size = 0x20000, scoped, tag = 'input window, operand 5']
    #allocation16 [shape = 's32[2]{0}', space=sflag, size = 0x8, scoped, tag = 'scoped memory for tpu_custom_call.1']
    #allocation17 [shape = 'u8[4096]{0}', space=vmem, size = 0x1000, scoped, tag = 'input window, operand 6, single buffered']
    #allocation18 [shape = 'u8[32768]{0}', space=vmem, size = 0x8000, scoped, tag = 'input window, operand 7, single buffered']
    #allocation19 [shape = 's32[1]{0}', space=sflag, size = 0x4, scoped, tag = 'scoped memory for tpu_custom_call.1']
    #allocation20 [shape = 'u8[8192]{0}', space=vmem, size = 0x2000, scoped, tag = 'output window, operand 0, single buffered']
    #allocation21 [shape = 'u8[8192]{0}', space=vmem, size = 0x2000, scoped, tag = 'output window, operand 1, single buffered']
    #allocation22 [shape = 's32[1]{0}', space=sflag, size = 0x4, scoped, tag = 'scoped memory for tpu_custom_call.1']
    #allocation23 [shape = 'u8[8192]{0}', space=vmem, size = 0x2000, scoped, tag = 'output window, operand 2, single buffered']
    %16 = vsyncpa [#allocation7], 0
    %s17 = scalar_lea.sflag [#allocation7], 1
    %18 = vsyncpa %s17, 0
    %19 = vsyncpa [#allocation10], 0
    %s20 = scalar_lea.sflag [#allocation10], 1
    %21 = vsyncpa %s20, 0
    %22 = vsyncpa [#allocation13], 0
    %s23 = scalar_lea.sflag [#allocation13], 1
    %24 = vsyncpa %s23, 0
    %25 = vsyncpa [#allocation16], 0
    %s26 = scalar_lea.sflag [#allocation16], 1
    %27 = vsyncpa %s26, 0
    %28 = vsyncpa [#allocation19], 0
    %29 = vsyncpa [#allocation8], 0
    %30 = vsyncpa [#allocation22], 0
    loop: start=0, step=1, limit=4
    $region2: #{tpu_custom_call.1} parent=1 // loop_pre_header
      _
    $region3: #{tpu_custom_call.1} parent=1 // loop_header
      %s32 = sphi 0, %s36
      %p33 = scmp.ge.s32.totalorder %s32, 4
      %s39 = sphi 0, %s51
      %s40 = sphi 0, %s47
      %s41 = sphi 0, %s39
      %s42 = sphi 0, %s40
      %s43 = sphi 0, %s41
      %s44 = sphi 0, %s42
      %s56 = sphi 0, %s58
      %s59 = sphi 0, %s56
      %s60 = sphi 0, %s59
      %s76 = sphi 0, %s60
      %s84 = sphi 0, %s86
      %s87 = sphi 0, %s84
      %s88 = sphi 0, %s87
      %s104 = sphi 0, %s88
      %s110 = sphi 0, %s112
      %s113 = sphi 0, %s110
      %s114 = sphi 0, %s113
      %s130 = sphi 0, %s114
      %s136 = sphi 0, %s138
      %s139 = sphi 0, %s136
      %s140 = sphi 0, %s139
      %s156 = sphi 0, %s140
      %s162 = sphi 0, %s164
      %s165 = sphi 0, %s162
      %s166 = sphi 0, %s165
      %s182 = sphi 0, %s166
      %s188 = sphi 0, %s190
      %s191 = sphi 0, %s188
      %s192 = sphi 0, %s191
      %s208 = sphi 0, %s192
      %s212 = sphi 0, %s212
      %s214 = sphi 0, %s212
      %s215 = sphi 0, %s214
      %s229 = sphi 0, %s215
      %s233 = sphi 0, %s233
      %s235 = sphi 0, %s233
      %s236 = sphi 0, %s235
      %s250 = sphi 0, %s236
      %s256 = sphi 0, %s258
      %s259 = sphi 0, %s256
      %s260 = sphi 0, %s259
      %s276 = sphi 0, %s260
      %s282 = sphi 0, %s284
      %s285 = sphi 0, %s282
      %s286 = sphi 0, %s285
      %s302 = sphi 0, %s286
      %s308 = sphi 0, %s310
      %s311 = sphi 0, %s308
      %s312 = sphi 0, %s311
      %s328 = sphi 0, %s312
    $region4: #{tpu_custom_call.1} parent=1 // loop_header_branch
      %35 = sbr.rel (%p33) target = $region8
    $region5: #{tpu_custom_call.1} parent=1 // loop_body
      %s37 = ssub.s32 %s32, 1
      %s38 = ssub.s32 %s32, 2
      %s45 = sadd.s32 1, %s40
      %p46 = scmp.ge.s32.totalorder %s45, 2
      %s47 = scalar_select %p46, 0, %s45
      %s48 = sadd.s32 1, %s39
      %s49 = scalar_select %p46, %s48, %s39
      %p50 = scmp.ge.s32.totalorder %s49, 1
      %s51 = scalar_select %p50, 0, %s49
      %s52 = ssub.s32 %s39, %s51
      %s53 = ssub.s32 %s40, %s47
      %s54 = sor.u32 %s52, %s53
      %p55 = scmp.eq.s32.totalorder %s54, 0
      %s57 = sadd.s32 %s56, 1
      %s58 = scalar_select %p55, %s56, %s57
      %p61 = pneg %p55
      %p62 = scmp.eq.s32.totalorder %s32, 1
      %p63 = por %p61, %p62
      %p64 = scmp.ne.s32.totalorder %s56, %s59
      %p65 = scmp.eq.s32.totalorder %s32, 0
      %p66 = por %p64, %p65
      %p67 = scmp.ne.s32.totalorder %s56, %s59
      %p68 = scmp.eq.s32.totalorder %s37, 1
      %p69 = por %p67, %p68
      %p70 = scmp.ne.s32.totalorder %s59, %s60
      %p71 = scmp.eq.s32.totalorder %s37, 0
      %p72 = por %p70, %p71
      %p73 = scmp.ne.s32.totalorder %s59, %s60
      %p74 = scmp.eq.s32.totalorder %s38, 1
      %p75 = por %p73, %p74
      %p77 = scmp.ne.s32.totalorder %s60, %s76
      %p78 = scmp.eq.s32.totalorder %s38, 0
      %p79 = por %p77, %p78
      %s80 = ssub.s32 %s39, %s51
      %s81 = ssub.s32 %s40, %s47
      %s82 = sor.u32 %s80, %s81
      %p83 = scmp.eq.s32.totalorder %s82, 0
      %s85 = sadd.s32 %s84, 1
      %s86 = scalar_select %p83, %s84, %s85
      %p89 = pneg %p83
      %p90 = scmp.eq.s32.totalorder %s32, 1
      %p91 = por %p89, %p90
      %p92 = scmp.ne.s32.totalorder %s84, %s87
      %p93 = scmp.eq.s32.totalorder %s32, 0
      %p94 = por %p92, %p93
      %p95 = scmp.ne.s32.totalorder %s84, %s87
      %p96 = scmp.eq.s32.totalorder %s37, 1
      %p97 = por %p95, %p96
      %p98 = scmp.ne.s32.totalorder %s87, %s88
      %p99 = scmp.eq.s32.totalorder %s37, 0
      %p100 = por %p98, %p99
      %p101 = scmp.ne.s32.totalorder %s87, %s88
      %p102 = scmp.eq.s32.totalorder %s38, 1
      %p103 = por %p101, %p102
      %p105 = scmp.ne.s32.totalorder %s88, %s104
      %p106 = scmp.eq.s32.totalorder %s38, 0
      %p107 = por %p105, %p106
      %s108 = ssub.s32 %s40, %s47
      %p109 = scmp.eq.s32.totalorder %s108, 0
      %s111 = sadd.s32 %s110, 1
      %s112 = scalar_select %p109, %s110, %s111
      %p115 = pneg %p109
      %p116 = scmp.eq.s32.totalorder %s32, 1
      %p117 = por %p115, %p116
      %p118 = scmp.ne.s32.totalorder %s110, %s113
      %p119 = scmp.eq.s32.totalorder %s32, 0
      %p120 = por %p118, %p119
      %p121 = scmp.ne.s32.totalorder %s110, %s113
      %p122 = scmp.eq.s32.totalorder %s37, 1
      %p123 = por %p121, %p122
      %p124 = scmp.ne.s32.totalorder %s113, %s114
      %p125 = scmp.eq.s32.totalorder %s37, 0
      %p126 = por %p124, %p125
      %p127 = scmp.ne.s32.totalorder %s113, %s114
      %p128 = scmp.eq.s32.totalorder %s38, 1
      %p129 = por %p127, %p128
      %p131 = scmp.ne.s32.totalorder %s114, %s130
      %p132 = scmp.eq.s32.totalorder %s38, 0
      %p133 = por %p131, %p132
      %s134 = ssub.s32 %s40, %s47
      %p135 = scmp.eq.s32.totalorder %s134, 0
      %s137 = sadd.s32 %s136, 1
      %s138 = scalar_select %p135, %s136, %s137
      %p141 = pneg %p135
      %p142 = scmp.eq.s32.totalorder %s32, 1
      %p143 = por %p141, %p142
      %p144 = scmp.ne.s32.totalorder %s136, %s139
      %p145 = scmp.eq.s32.totalorder %s32, 0
      %p146 = por %p144, %p145
      %p147 = scmp.ne.s32.totalorder %s136, %s139
      %p148 = scmp.eq.s32.totalorder %s37, 1
      %p149 = por %p147, %p148
      %p150 = scmp.ne.s32.totalorder %s139, %s140
      %p151 = scmp.eq.s32.totalorder %s37, 0
      %p152 = por %p150, %p151
      %p153 = scmp.ne.s32.totalorder %s139, %s140
      %p154 = scmp.eq.s32.totalorder %s38, 1
      %p155 = por %p153, %p154
      %p157 = scmp.ne.s32.totalorder %s140, %s156
      %p158 = scmp.eq.s32.totalorder %s38, 0
      %p159 = por %p157, %p158
      %s160 = ssub.s32 %s40, %s47
      %p161 = scmp.eq.s32.totalorder %s160, 0
      %s163 = sadd.s32 %s162, 1
      %s164 = scalar_select %p161, %s162, %s163
      %p167 = pneg %p161
      %p168 = scmp.eq.s32.totalorder %s32, 1
      %p169 = por %p167, %p168
      %p170 = scmp.ne.s32.totalorder %s162, %s165
      %p171 = scmp.eq.s32.totalorder %s32, 0
      %p172 = por %p170, %p171
      %p173 = scmp.ne.s32.totalorder %s162, %s165
      %p174 = scmp.eq.s32.totalorder %s37, 1
      %p175 = por %p173, %p174
      %p176 = scmp.ne.s32.totalorder %s165, %s166
      %p177 = scmp.eq.s32.totalorder %s37, 0
      %p178 = por %p176, %p177
      %p179 = scmp.ne.s32.totalorder %s165, %s166
      %p180 = scmp.eq.s32.totalorder %s38, 1
      %p181 = por %p179, %p180
      %p183 = scmp.ne.s32.totalorder %s166, %s182
      %p184 = scmp.eq.s32.totalorder %s38, 0
      %p185 = por %p183, %p184
      %s186 = ssub.s32 %s40, %s47
      %p187 = scmp.eq.s32.totalorder %s186, 0
      %s189 = sadd.s32 %s188, 1
      %s190 = scalar_select %p187, %s188, %s189
      %p193 = pneg %p187
      %p194 = scmp.eq.s32.totalorder %s32, 1
      %p195 = por %p193, %p194
      %p196 = scmp.ne.s32.totalorder %s188, %s191
      %p197 = scmp.eq.s32.totalorder %s32, 0
      %p198 = por %p196, %p197
      %p199 = scmp.ne.s32.totalorder %s188, %s191
      %p200 = scmp.eq.s32.totalorder %s37, 1
      %p201 = por %p199, %p200
      %p202 = scmp.ne.s32.totalorder %s191, %s192
      %p203 = scmp.eq.s32.totalorder %s37, 0
      %p204 = por %p202, %p203
      %p205 = scmp.ne.s32.totalorder %s191, %s192
      %p206 = scmp.eq.s32.totalorder %s38, 1
      %p207 = por %p205, %p206
      %p209 = scmp.ne.s32.totalorder %s192, %s208
      %p210 = scmp.eq.s32.totalorder %s38, 0
      %p211 = por %p209, %p210
      %s213 = sadd.s32 %s212, 1
      %p216 = scmp.eq.s32.totalorder %s32, 1
      %p217 = scmp.ne.s32.totalorder %s212, %s214
      %p218 = scmp.eq.s32.totalorder %s32, 0
      %p219 = por %p217, %p218
      %p220 = scmp.ne.s32.totalorder %s212, %s214
      %p221 = scmp.eq.s32.totalorder %s37, 1
      %p222 = por %p220, %p221
      %p223 = scmp.ne.s32.totalorder %s214, %s215
      %p224 = scmp.eq.s32.totalorder %s37, 0
      %p225 = por %p223, %p224
      %p226 = scmp.ne.s32.totalorder %s214, %s215
      %p227 = scmp.eq.s32.totalorder %s38, 1
      %p228 = por %p226, %p227
      %p230 = scmp.ne.s32.totalorder %s215, %s229
      %p231 = scmp.eq.s32.totalorder %s38, 0
      %p232 = por %p230, %p231
      %s234 = sadd.s32 %s233, 1
      %p237 = scmp.eq.s32.totalorder %s32, 1
      %p238 = scmp.ne.s32.totalorder %s233, %s235
      %p239 = scmp.eq.s32.totalorder %s32, 0
      %p240 = por %p238, %p239
      %p241 = scmp.ne.s32.totalorder %s233, %s235
      %p242 = scmp.eq.s32.totalorder %s37, 1
      %p243 = por %p241, %p242
      %p244 = scmp.ne.s32.totalorder %s235, %s236
      %p245 = scmp.eq.s32.totalorder %s37, 0
      %p246 = por %p244, %p245
      %p247 = scmp.ne.s32.totalorder %s235, %s236
      %p248 = scmp.eq.s32.totalorder %s38, 1
      %p249 = por %p247, %p248
      %p251 = scmp.ne.s32.totalorder %s236, %s250
      %p252 = scmp.eq.s32.totalorder %s38, 0
      %p253 = por %p251, %p252
      %s254 = ssub.s32 %s39, %s51
      %p255 = scmp.eq.s32.totalorder %s254, 0
      %s257 = sadd.s32 %s256, 1
      %s258 = scalar_select %p255, %s256, %s257
      %p261 = pneg %p255
      %p262 = scmp.eq.s32.totalorder %s32, 1
      %p263 = por %p261, %p262
      %p264 = scmp.ne.s32.totalorder %s256, %s259
      %p265 = scmp.eq.s32.totalorder %s32, 0
      %p266 = por %p264, %p265
      %p267 = scmp.ne.s32.totalorder %s256, %s259
      %p268 = scmp.eq.s32.totalorder %s37, 1
      %p269 = por %p267, %p268
      %p270 = scmp.ne.s32.totalorder %s259, %s260
      %p271 = scmp.eq.s32.totalorder %s37, 0
      %p272 = por %p270, %p271
      %p273 = scmp.ne.s32.totalorder %s259, %s260
      %p274 = scmp.eq.s32.totalorder %s38, 1
      %p275 = por %p273, %p274
      %p277 = scmp.ne.s32.totalorder %s260, %s276
      %p278 = scmp.eq.s32.totalorder %s38, 0
      %p279 = por %p277, %p278
      %s280 = ssub.s32 %s39, %s51
      %p281 = scmp.eq.s32.totalorder %s280, 0
      %s283 = sadd.s32 %s282, 1
      %s284 = scalar_select %p281, %s282, %s283
      %p287 = pneg %p281
      %p288 = scmp.eq.s32.totalorder %s32, 1
      %p289 = por %p287, %p288
      %p290 = scmp.ne.s32.totalorder %s282, %s285
      %p291 = scmp.eq.s32.totalorder %s32, 0
      %p292 = por %p290, %p291
      %p293 = scmp.ne.s32.totalorder %s282, %s285
      %p294 = scmp.eq.s32.totalorder %s37, 1
      %p295 = por %p293, %p294
      %p296 = scmp.ne.s32.totalorder %s285, %s286
      %p297 = scmp.eq.s32.totalorder %s37, 0
      %p298 = por %p296, %p297
      %p299 = scmp.ne.s32.totalorder %s285, %s286
      %p300 = scmp.eq.s32.totalorder %s38, 1
      %p301 = por %p299, %p300
      %p303 = scmp.ne.s32.totalorder %s286, %s302
      %p304 = scmp.eq.s32.totalorder %s38, 0
      %p305 = por %p303, %p304
      %s306 = ssub.s32 %s39, %s51
      %p307 = scmp.eq.s32.totalorder %s306, 0
      %s309 = sadd.s32 %s308, 1
      %s310 = scalar_select %p307, %s308, %s309
      %p313 = pneg %p307
      %p314 = scmp.eq.s32.totalorder %s32, 1
      %p315 = por %p313, %p314
      %p316 = scmp.ne.s32.totalorder %s308, %s311
      %p317 = scmp.eq.s32.totalorder %s32, 0
      %p318 = por %p316, %p317
      %p319 = scmp.ne.s32.totalorder %s308, %s311
      %p320 = scmp.eq.s32.totalorder %s37, 1
      %p321 = por %p319, %p320
      %p322 = scmp.ne.s32.totalorder %s311, %s312
      %p323 = scmp.eq.s32.totalorder %s37, 0
      %p324 = por %p322, %p323
      %p325 = scmp.ne.s32.totalorder %s311, %s312
      %p326 = scmp.eq.s32.totalorder %s38, 1
      %p327 = por %p325, %p326
      %p329 = scmp.ne.s32.totalorder %s312, %s328
      %p330 = scmp.eq.s32.totalorder %s38, 0
      %p331 = por %p329, %p330
      %p332 = scmp.le.s32.totalorder 1, %s32
      %p333 = scmp.lt.s32.totalorder %s32, 3
      %p334 = pnand %p332, %p333
      %p335 = pneg %p334
      // Predicated region
      $region9: #{tpu_custom_call.1} parent=5 // pred_check
        _
      $region10: #{tpu_custom_call.1} parent=5 // pred_check_branch
        %337 = sbr.rel (%p334) target = $region12
      $region11: #{tpu_custom_call.1} parent=5 // pred_region
        %s338 = ssub.s32 %s32, 1
        // Predicated region
        $region13: #{tpu_custom_call.1} parent=11 // pred_check
          %p339 = pneg %p225
        $region14: #{tpu_custom_call.1} parent=11 // pred_check_branch
          %341 = sbr.rel (%p339) target = $region16
        $region15: #{tpu_custom_call.1} parent=11 // pred_region
          %343 = vsyncadd [#allocation16], 0
          %s345 = sshll.u32 %s6, 4
          %s346 = int_to_ptr.hbm [resolvable:$true] %s345
          %s347 = sshll.u32 [#allocation17], 4
          %s348 = int_to_ptr.vmem [resolvable:$true] %s347
          %350 = dma.hbm_to_vmem [thread:$0]  %s346, 128, %s348, [#allocation16]
        $region16: #{tpu_custom_call.1} parent=11 // pred_fallthru
          _
        // Predicated region
        $region17: #{tpu_custom_call.1} parent=11 // pred_check
          %p351 = pneg %p246
        $region18: #{tpu_custom_call.1} parent=11 // pred_check_branch
          %353 = sbr.rel (%p351) target = $region20
        $region19: #{tpu_custom_call.1} parent=11 // pred_region
          %355 = vsyncadd [#allocation19], 0
          %s356 = sshll.u32 %s7, 4
          %s357 = int_to_ptr.hbm [resolvable:$true] %s356
          %s358 = sshll.u32 [#allocation18], 4
          %s359 = int_to_ptr.vmem [resolvable:$true] %s358
          %364 = dma.hbm_to_vmem [thread:$0]  %s357, 1024, %s359, [#allocation19], 64, 64, 4
        $region20: #{tpu_custom_call.1} parent=11 // pred_fallthru
          _
      $region12: #{tpu_custom_call.1} parent=5 // pred_fallthru
        _
      %p365 = scmp.lt.s32.totalorder %s32, 2
      // Predicated region
      $region21: #{tpu_custom_call.1} parent=5 // pred_check
        %p366 = pneg %p365
      $region22: #{tpu_custom_call.1} parent=5 // pred_check_branch
        %368 = sbr.rel (%p366) target = $region24
      $region23: #{tpu_custom_call.1} parent=5 // pred_region
        // Predicated region
        $region25: #{tpu_custom_call.1} parent=23 // pred_check
          %p369 = pneg %p66
        $region26: #{tpu_custom_call.1} parent=23 // pred_check_branch
          %371 = sbr.rel (%p369) target = $region28
        $region27: #{tpu_custom_call.1} parent=23 // pred_region
          %s372 = sand.u32 %s56, 1
          %s373 = scalar_lea.sflag [#allocation7], %s372
          %s374 = sand.u32 %s56, 1
          %s375 = smul.addr %s374, 32
          %s376 = scalar_lea.vmem [#allocation6], %s375
          %s377 = smul.u32 2, %s39
          %s378 = smul.u32 2, %s40
          %380 = vsyncadd %s373, 0
          %s381 = smul.addr %s377, 4
          %s382 = sadd.s32 %s378, %s381
          %s383 = smul.addr %s382, 8
          %s384 = scalar_lea.hbm %s0, %s383
          %s385 = sshll.u32 %s384, 4
          %s386 = int_to_ptr.hbm [resolvable:$true] %s385
          %s387 = sshll.u32 %s376, 4
          %s388 = int_to_ptr.vmem [resolvable:$true] %s387
          %393 = dma.hbm_to_vmem [thread:$0]  %s386, 512, %s388, %s373, 512, 256, 16
        $region28: #{tpu_custom_call.1} parent=23 // pred_fallthru
          _
        // Predicated region
        $region29: #{tpu_custom_call.1} parent=23 // pred_check
          %p394 = pneg %p94
        $region30: #{tpu_custom_call.1} parent=23 // pred_check_branch
          %396 = sbr.rel (%p394) target = $region32
        $region31: #{tpu_custom_call.1} parent=23 // pred_region
          %s397 = sand.u32 %s32, 1
          %s398 = scalar_lea.sflag [#allocation10], %s397
          %s399 = sand.u32 %s84, 1
          %s400 = smul.addr %s399, 32
          %s401 = scalar_lea.vmem [#allocation9], %s400
          %s402 = smul.u32 2, %s39
          %s403 = smul.u32 2, %s40
          %405 = vsyncadd %s398, 0
          %s406 = smul.addr %s402, 4
          %s407 = sadd.s32 %s403, %s406
          %s408 = smul.addr %s407, 8
          %s409 = scalar_lea.hbm %s1, %s408
          %s410 = sshll.u32 %s409, 4
          %s411 = int_to_ptr.hbm [resolvable:$true] %s410
          %s412 = sshll.u32 %s401, 4
          %s413 = int_to_ptr.vmem [resolvable:$true] %s412
          %418 = dma.hbm_to_vmem [thread:$0]  %s411, 512, %s413, %s398, 512, 256, 16
        $region32: #{tpu_custom_call.1} parent=23 // pred_fallthru
          _
        // Predicated region
        $region33: #{tpu_custom_call.1} parent=23 // pred_check
          %p419 = pneg %p120
        $region34: #{tpu_custom_call.1} parent=23 // pred_check_branch
          %421 = sbr.rel (%p419) target = $region36
        $region35: #{tpu_custom_call.1} parent=23 // pred_region
          %s422 = sand.u32 %s32, 1
          %s423 = scalar_lea.sflag [#allocation10], %s422
          %s424 = sand.u32 %s110, 1
          %s425 = smul.addr %s424, 128
          %s426 = scalar_lea.vmem [#allocation11], %s425
          %s427 = smul.u32 32, %s40
          %429 = vsyncadd %s423, 0
          %s430 = smul.addr %s427, 4
          %s431 = scalar_lea.hbm %s2, %s430
          %s432 = sshll.u32 %s431, 4
          %s433 = int_to_ptr.hbm [resolvable:$true] %s432
          %s434 = sshll.u32 %s426, 4
          %s435 = int_to_ptr.vmem [resolvable:$true] %s434
          %440 = dma.hbm_to_vmem [thread:$0]  %s433, 2048, %s435, %s423, 64, 64, 4
        $region36: #{tpu_custom_call.1} parent=23 // pred_fallthru
          _
        // Predicated region
        $region37: #{tpu_custom_call.1} parent=23 // pred_check
          %p441 = pneg %p146
        $region38: #{tpu_custom_call.1} parent=23 // pred_check_branch
          %443 = sbr.rel (%p441) target = $region40
        $region39: #{tpu_custom_call.1} parent=23 // pred_region
          %s444 = sand.u32 %s32, 1
          %s445 = scalar_lea.sflag [#allocation13], %s444
          %s446 = sand.u32 %s136, 1
          %s447 = smul.addr %s446, 128
          %s448 = scalar_lea.vmem [#allocation12], %s447
          %s449 = smul.u32 32, %s40
          %451 = vsyncadd %s445, 0
          %s452 = smul.addr %s449, 4
          %s453 = scalar_lea.hbm %s3, %s452
          %s454 = sshll.u32 %s453, 4
          %s455 = int_to_ptr.hbm [resolvable:$true] %s454
          %s456 = sshll.u32 %s448, 4
          %s457 = int_to_ptr.vmem [resolvable:$true] %s456
          %462 = dma.hbm_to_vmem [thread:$0]  %s455, 2048, %s457, %s445, 64, 64, 4
        $region40: #{tpu_custom_call.1} parent=23 // pred_fallthru
          _
        // Predicated region
        $region41: #{tpu_custom_call.1} parent=23 // pred_check
          %p463 = pneg %p172
        $region42: #{tpu_custom_call.1} parent=23 // pred_check_branch
          %465 = sbr.rel (%p463) target = $region44
        $region43: #{tpu_custom_call.1} parent=23 // pred_region
          %s466 = sand.u32 %s32, 1
          %s467 = scalar_lea.sflag [#allocation13], %s466
          %s468 = sand.u32 %s162, 1
          %s469 = smul.addr %s468, 128
          %s470 = scalar_lea.vmem [#allocation14], %s469
          %s471 = smul.u32 32, %s40
          %473 = vsyncadd %s467, 0
          %s474 = smul.addr %s471, 4
          %s475 = scalar_lea.hbm %s4, %s474
          %s476 = sshll.u32 %s475, 4
          %s477 = int_to_ptr.hbm [resolvable:$true] %s476
          %s478 = sshll.u32 %s470, 4
          %s479 = int_to_ptr.vmem [resolvable:$true] %s478
          %484 = dma.hbm_to_vmem [thread:$0]  %s477, 2048, %s479, %s467, 64, 64, 4
        $region44: #{tpu_custom_call.1} parent=23 // pred_fallthru
          _
        // Predicated region
        $region45: #{tpu_custom_call.1} parent=23 // pred_check
          %p485 = pneg %p198
        $region46: #{tpu_custom_call.1} parent=23 // pred_check_branch
          %487 = sbr.rel (%p485) target = $region48
        $region47: #{tpu_custom_call.1} parent=23 // pred_region
          %s488 = sand.u32 %s32, 1
          %s489 = scalar_lea.sflag [#allocation16], %s488
          %s490 = sand.u32 %s188, 1
          %s491 = smul.addr %s490, 128
          %s492 = scalar_lea.vmem [#allocation15], %s491
          %s493 = smul.u32 32, %s40
          %495 = vsyncadd %s489, 0
          %s496 = smul.addr %s493, 4
          %s497 = scalar_lea.hbm %s5, %s496
          %s498 = sshll.u32 %s497, 4
          %s499 = int_to_ptr.hbm [resolvable:$true] %s498
          %s500 = sshll.u32 %s492, 4
          %s501 = int_to_ptr.vmem [resolvable:$true] %s500
          %506 = dma.hbm_to_vmem [thread:$0]  %s499, 2048, %s501, %s489, 64, 64, 4
        $region48: #{tpu_custom_call.1} parent=23 // pred_fallthru
          _
      $region24: #{tpu_custom_call.1} parent=5 // pred_fallthru
        _
      %p507 = scmp.le.s32.totalorder 1, %s32
      %p508 = scmp.lt.s32.totalorder %s32, 3
      %p509 = pnand %p507, %p508
      %p510 = pneg %p509
      // Predicated region
      $region49: #{tpu_custom_call.1} parent=5 // pred_check
        _
      $region50: #{tpu_custom_call.1} parent=5 // pred_check_branch
        %512 = sbr.rel (%p509) target = $region52
      $region51: #{tpu_custom_call.1} parent=5 // pred_region
        %s513 = ssub.s32 %s32, 1
        %s514 = sand.u32 %s59, 1
        %s515 = scalar_lea.sflag [#allocation7], %s514
        %s516 = sand.u32 %s59, 1
        %s517 = smul.addr %s516, 32
        %s518 = scalar_lea.vmem [#allocation6], %s517
        // Predicated region
        $region53: #{tpu_custom_call.1} parent=51 // pred_check
          %p519 = pneg %p72
        $region54: #{tpu_custom_call.1} parent=51 // pred_check_branch
          %521 = sbr.rel (%p519) target = $region56
        $region55: #{tpu_custom_call.1} parent=51 // pred_region
          %523 = dma.done %s515, 512
        $region56: #{tpu_custom_call.1} parent=51 // pred_fallthru
          _
        %s524 = sand.u32 %s37, 1
        %s525 = scalar_lea.sflag [#allocation10], %s524
        %s526 = sand.u32 %s87, 1
        %s527 = smul.addr %s526, 32
        %s528 = scalar_lea.vmem [#allocation9], %s527
        // Predicated region
        $region57: #{tpu_custom_call.1} parent=51 // pred_check
          %p529 = pneg %p100
        $region58: #{tpu_custom_call.1} parent=51 // pred_check_branch
          %531 = sbr.rel (%p529) target = $region60
        $region59: #{tpu_custom_call.1} parent=51 // pred_region
          %533 = dma.done %s525, 512
        $region60: #{tpu_custom_call.1} parent=51 // pred_fallthru
          _
        %s534 = sand.u32 %s37, 1
        %s535 = scalar_lea.sflag [#allocation10], %s534
        %s536 = sand.u32 %s113, 1
        %s537 = smul.addr %s536, 128
        %s538 = scalar_lea.vmem [#allocation11], %s537
        // Predicated region
        $region61: #{tpu_custom_call.1} parent=51 // pred_check
          %p539 = pneg %p126
        $region62: #{tpu_custom_call.1} parent=51 // pred_check_branch
          %541 = sbr.rel (%p539) target = $region64
        $region63: #{tpu_custom_call.1} parent=51 // pred_region
          %543 = dma.done %s535, 2048
        $region64: #{tpu_custom_call.1} parent=51 // pred_fallthru
          _
        %s544 = sand.u32 %s37, 1
        %s545 = scalar_lea.sflag [#allocation13], %s544
        %s546 = sand.u32 %s139, 1
        %s547 = smul.addr %s546, 128
        %s548 = scalar_lea.vmem [#allocation12], %s547
        // Predicated region
        $region65: #{tpu_custom_call.1} parent=51 // pred_check
          %p549 = pneg %p152
        $region66: #{tpu_custom_call.1} parent=51 // pred_check_branch
          %551 = sbr.rel (%p549) target = $region68
        $region67: #{tpu_custom_call.1} parent=51 // pred_region
          %553 = dma.done %s545, 2048
        $region68: #{tpu_custom_call.1} parent=51 // pred_fallthru
          _
        %s554 = sand.u32 %s37, 1
        %s555 = scalar_lea.sflag [#allocation13], %s554
        %s556 = sand.u32 %s165, 1
        %s557 = smul.addr %s556, 128
        %s558 = scalar_lea.vmem [#allocation14], %s557
        // Predicated region
        $region69: #{tpu_custom_call.1} parent=51 // pred_check
          %p559 = pneg %p178
        $region70: #{tpu_custom_call.1} parent=51 // pred_check_branch
          %561 = sbr.rel (%p559) target = $region72
        $region71: #{tpu_custom_call.1} parent=51 // pred_region
          %563 = dma.done %s555, 2048
        $region72: #{tpu_custom_call.1} parent=51 // pred_fallthru
          _
        %s564 = sand.u32 %s37, 1
        %s565 = scalar_lea.sflag [#allocation16], %s564
        %s566 = sand.u32 %s191, 1
        %s567 = smul.addr %s566, 128
        %s568 = scalar_lea.vmem [#allocation15], %s567
        // Predicated region
        $region73: #{tpu_custom_call.1} parent=51 // pred_check
          %p569 = pneg %p204
        $region74: #{tpu_custom_call.1} parent=51 // pred_check_branch
          %571 = sbr.rel (%p569) target = $region76
        $region75: #{tpu_custom_call.1} parent=51 // pred_region
          %573 = dma.done %s565, 2048
        $region76: #{tpu_custom_call.1} parent=51 // pred_fallthru
          _
        // Predicated region
        $region77: #{tpu_custom_call.1} parent=51 // pred_check
          %p574 = pneg %p225
        $region78: #{tpu_custom_call.1} parent=51 // pred_check_branch
          %576 = sbr.rel (%p574) target = $region80
        $region79: #{tpu_custom_call.1} parent=51 // pred_region
          %578 = dma.done [#allocation16], 128
        $region80: #{tpu_custom_call.1} parent=51 // pred_fallthru
          _
        // Predicated region
        $region81: #{tpu_custom_call.1} parent=51 // pred_check
          %p579 = pneg %p246
        $region82: #{tpu_custom_call.1} parent=51 // pred_check_branch
          %581 = sbr.rel (%p579) target = $region84
        $region83: #{tpu_custom_call.1} parent=51 // pred_region
          %583 = dma.done [#allocation19], 1024
        $region84: #{tpu_custom_call.1} parent=51 // pred_fallthru
          _
        %s584 = sand.u32 %s59, 1
        %s585 = scalar_lea.sflag [#allocation7], %s584
        %s586 = sand.u32 %s59, 1
        %s587 = smul.addr %s586, 32
        %s588 = scalar_lea.vmem [#allocation6], %s587
        %p589 = pneg %p72
        %p590 = pneg %p69
        %s591 = sand.u32 %s37, 1
        %s592 = scalar_lea.sflag [#allocation10], %s591
        %s593 = sand.u32 %s87, 1
        %s594 = smul.addr %s593, 32
        %s595 = scalar_lea.vmem [#allocation9], %s594
        %p596 = pneg %p100
        %p597 = pneg %p97
        %s598 = sand.u32 %s37, 1
        %s599 = scalar_lea.sflag [#allocation10], %s598
        %s600 = sand.u32 %s113, 1
        %s601 = smul.addr %s600, 128
        %s602 = scalar_lea.vmem [#allocation11], %s601
        %p603 = pneg %p126
        %p604 = pneg %p123
        %s605 = sand.u32 %s37, 1
        %s606 = scalar_lea.sflag [#allocation13], %s605
        %s607 = sand.u32 %s139, 1
        %s608 = smul.addr %s607, 128
        %s609 = scalar_lea.vmem [#allocation12], %s608
        %p610 = pneg %p152
        %p611 = pneg %p149
        %s612 = sand.u32 %s37, 1
        %s613 = scalar_lea.sflag [#allocation13], %s612
        %s614 = sand.u32 %s165, 1
        %s615 = smul.addr %s614, 128
        %s616 = scalar_lea.vmem [#allocation14], %s615
        %p617 = pneg %p178
        %p618 = pneg %p175
        %s619 = sand.u32 %s37, 1
        %s620 = scalar_lea.sflag [#allocation16], %s619
        %s621 = sand.u32 %s191, 1
        %s622 = smul.addr %s621, 128
        %s623 = scalar_lea.vmem [#allocation15], %s622
        %p624 = pneg %p204
        %p625 = pneg %p201
        %p626 = pneg %p225
        %p627 = pneg %p222
        %p628 = pneg %p246
        %p629 = pneg %p243
        %p630 = pneg %p272
        %p631 = pneg %p269
        %p632 = pneg %p298
        %p633 = pneg %p295
        %p634 = pneg %p324
        %p635 = pneg %p321
        %s636 = smul.u32 2, %s41
        %s637 = smul.u32 2, %s42
        %s638 = smul.u32 2, %s41
        %s639 = smul.u32 2, %s42
        %s640 = smul.u32 32, %s42
        %s641 = smul.u32 32, %s42
        %s642 = smul.u32 32, %s42
        %s643 = smul.u32 32, %s42
        %s644 = smul.u32 2, %s41
        %s645 = smul.u32 2, %s41
        %s646 = smul.u32 2, %s41
        %p647 = scmp.eq.s32.totalorder %s42, 0
        // Predicated region
        $region85: #{tpu_custom_call.1} parent=51 // pred_check
          %p648 = pneg %p647
        $region86: #{tpu_custom_call.1} parent=51 // pred_check_branch
          %650 = sbr.rel (%p648) target = $region88
        $region87: #{tpu_custom_call.1} parent=51 // pred_region
          %651 = vst [vmem:[#allocation2] sm:$0xff] 0.0
          %652 = vst [vmem:[#allocation2 + $0x8] sm:$0xff] 0.0
          %653 = vst [vmem:[#allocation3] sm:$0xff] 0.0
          %654 = vst [vmem:[#allocation3 + $0x8] sm:$0xff] 0.0
          %655 = vst [vmem:[#allocation4] sm:$0xff] 0.0
          %656 = vst [vmem:[#allocation4 + $0x8] sm:$0xff] 0.0
        $region88: #{tpu_custom_call.1} parent=51 // pred_fallthru
          _
        %v657 = vld [vmem:[%s518] sm:$0xff]
        %v658 = vld [vmem:[%s518 + $0x8] sm:$0xff]
        %v659 = vld [vmem:[%s518 + $0x10] sm:$0xff]
        %v660 = vld [vmem:[%s518 + $0x18] sm:$0xff]
        %v661 = vpack.c.bf16 %v659, %v657
        %v662 = vpack.c.bf16 %v660, %v658
        %v663 = vld [vmem:[%s528] sm:$0xff]
        %v664 = vld [vmem:[%s528 + $0x8] sm:$0xff]
        %v665 = vld [vmem:[%s528 + $0x10] sm:$0xff]
        %v666 = vld [vmem:[%s528 + $0x18] sm:$0xff]
        %v667 = vpack.c.bf16 %v665, %v663
        %v668 = vpack.c.bf16 %v666, %v664
        %v669 = vld [vmem:[#allocation2] sm:$0xff]
        %v670 = vld [vmem:[#allocation2 + $0x8] sm:$0xff]
        %v671 = vld [vmem:[%s538] sm:$0xf]
        %v672 = vld [vmem:[%s538 + $0x4] sm:$0xf]
        %v673 = vld [vmem:[%s538 + $0x8] sm:$0xf]
        %v674 = vld [vmem:[%s538 + $0xc] sm:$0xf]
        %v675 = vld [vmem:[%s538 + $0x10] sm:$0xf]
        %v676 = vld [vmem:[%s538 + $0x14] sm:$0xf]
        %v677 = vld [vmem:[%s538 + $0x18] sm:$0xf]
        %v678 = vld [vmem:[%s538 + $0x1c] sm:$0xf]
        %v679 = vld [vmem:[%s538 + $0x20] sm:$0xf]
        %v680 = vld [vmem:[%s538 + $0x24] sm:$0xf]
        %v681 = vld [vmem:[%s538 + $0x28] sm:$0xf]
        %v682 = vld [vmem:[%s538 + $0x2c] sm:$0xf]
        %v683 = vld [vmem:[%s538 + $0x30] sm:$0xf]
        %v684 = vld [vmem:[%s538 + $0x34] sm:$0xf]
        %v685 = vld [vmem:[%s538 + $0x38] sm:$0xf]
        %v686 = vld [vmem:[%s538 + $0x3c] sm:$0xf]
        %v687 = vld [vmem:[%s538 + $0x40] sm:$0xf]
        %v688 = vld [vmem:[%s538 + $0x44] sm:$0xf]
        %v689 = vld [vmem:[%s538 + $0x48] sm:$0xf]
        %v690 = vld [vmem:[%s538 + $0x4c] sm:$0xf]
        %v691 = vld [vmem:[%s538 + $0x50] sm:$0xf]
        %v692 = vld [vmem:[%s538 + $0x54] sm:$0xf]
        %v693 = vld [vmem:[%s538 + $0x58] sm:$0xf]
        %v694 = vld [vmem:[%s538 + $0x5c] sm:$0xf]
        %v695 = vld [vmem:[%s538 + $0x60] sm:$0xf]
        %v696 = vld [vmem:[%s538 + $0x64] sm:$0xf]
        %v697 = vld [vmem:[%s538 + $0x68] sm:$0xf]
        %v698 = vld [vmem:[%s538 + $0x6c] sm:$0xf]
        %v699 = vld [vmem:[%s538 + $0x70] sm:$0xf]
        %v700 = vld [vmem:[%s538 + $0x74] sm:$0xf]
        %v701 = vld [vmem:[%s538 + $0x78] sm:$0xf]
        %v702 = vld [vmem:[%s538 + $0x7c] sm:$0xf]
        %v735 = vunpack.c.l.b16 %v671
        %v736 = vunpack.c.l.b16 %v672
        %v737 = vunpack.c.l.b16 %v673
        %v738 = vunpack.c.l.b16 %v674
        %v739 = vunpack.c.l.b16 %v675
        %v740 = vunpack.c.l.b16 %v676
        %v741 = vunpack.c.l.b16 %v677
        %v742 = vunpack.c.l.b16 %v678
        %v743 = vunpack.c.l.b16 %v679
        %v744 = vunpack.c.l.b16 %v680
        %v745 = vunpack.c.l.b16 %v681
        %v746 = vunpack.c.l.b16 %v682
        %v747 = vunpack.c.l.b16 %v683
        %v748 = vunpack.c.l.b16 %v684
        %v749 = vunpack.c.l.b16 %v685
        %v750 = vunpack.c.l.b16 %v686
        %v751 = vunpack.c.l.b16 %v687
        %v752 = vunpack.c.l.b16 %v688
        %v753 = vunpack.c.l.b16 %v689
        %v754 = vunpack.c.l.b16 %v690
        %v755 = vunpack.c.l.b16 %v691
        %v756 = vunpack.c.l.b16 %v692
        %v757 = vunpack.c.l.b16 %v693
        %v758 = vunpack.c.l.b16 %v694
        %v759 = vunpack.c.l.b16 %v695
        %v760 = vunpack.c.l.b16 %v696
        %v761 = vunpack.c.l.b16 %v697
        %v762 = vunpack.c.l.b16 %v698
        %v763 = vunpack.c.l.b16 %v699
        %v764 = vunpack.c.l.b16 %v700
        %v765 = vunpack.c.l.b16 %v701
        %v766 = vunpack.c.l.b16 %v702
        %v767 = vpack.c.b16 %v736, %v735
        %v768 = vpack.c.b16 %v738, %v737
        %v769 = vpack.c.b16 %v740, %v739
        %v770 = vpack.c.b16 %v742, %v741
        %v771 = vpack.c.b16 %v744, %v743
        %v772 = vpack.c.b16 %v746, %v745
        %v773 = vpack.c.b16 %v748, %v747
        %v774 = vpack.c.b16 %v750, %v749
        %v775 = vpack.c.b16 %v752, %v751
        %v776 = vpack.c.b16 %v754, %v753
        %v777 = vpack.c.b16 %v756, %v755
        %v778 = vpack.c.b16 %v758, %v757
        %v779 = vpack.c.b16 %v760, %v759
        %v780 = vpack.c.b16 %v762, %v761
        %v781 = vpack.c.b16 %v764, %v763
        %v782 = vpack.c.b16 %v766, %v765
        %799 = vmatpush.bf16.msra.mxu0 %v774
        %800 = vmatpush.bf16.msra.mxu0 %v773
        %801 = vmatpush.bf16.msra.mxu0 %v772
        %802 = vmatpush.bf16.msra.mxu0 %v771
        %803 = vmatpush.bf16.msra.mxu0 %v770
        %804 = vmatpush.bf16.msra.mxu0 %v769
        %805 = vmatpush.bf16.msra.mxu0 %v768
        %806 = vmatpush.bf16.msra.mxu0 %v767
        %807 = vmatmul.bf16.gmra.mxu0 %v661
        %v808 = vpop.f32.mrf.mxu0
        %v809 = vadd.f32 0.0, %v808
        %v810 = vpop.f32.mrf.mxu0
        %v811 = vadd.f32 0.0, %v810
        %812 = vdwg.mxu0
        %813 = vmatpush.bf16.msra.mxu0 %v782
        %814 = vmatpush.bf16.msra.mxu0 %v781
        %815 = vmatpush.bf16.msra.mxu0 %v780
        %816 = vmatpush.bf16.msra.mxu0 %v779
        %817 = vmatpush.bf16.msra.mxu0 %v778
        %818 = vmatpush.bf16.msra.mxu0 %v777
        %819 = vmatpush.bf16.msra.mxu0 %v776
        %820 = vmatpush.bf16.msra.mxu0 %v775
        %821 = vmatmul.bf16.gmra.mxu0 %v662
        %v822 = vpop.f32.mrf.mxu0
        %v823 = vadd.f32 %v809, %v822
        %v824 = vpop.f32.mrf.mxu0
        %v825 = vadd.f32 %v811, %v824
        %826 = vdwg.mxu0
        %v827 = vadd.f32 %v669, %v823
        %v828 = vadd.f32 %v670, %v825
        %829 = vst [vmem:[#allocation2] sm:$0xff] %v827
        %830 = vst [vmem:[#allocation2 + $0x8] sm:$0xff] %v828
        %v831 = vld [vmem:[#allocation3] sm:$0xff]
        %v832 = vld [vmem:[#allocation3 + $0x8] sm:$0xff]
        %v833 = vld [vmem:[%s548] sm:$0xf]
        %v834 = vld [vmem:[%s548 + $0x4] sm:$0xf]
        %v835 = vld [vmem:[%s548 + $0x8] sm:$0xf]
        %v836 = vld [vmem:[%s548 + $0xc] sm:$0xf]
        %v837 = vld [vmem:[%s548 + $0x10] sm:$0xf]
        %v838 = vld [vmem:[%s548 + $0x14] sm:$0xf]
        %v839 = vld [vmem:[%s548 + $0x18] sm:$0xf]
        %v840 = vld [vmem:[%s548 + $0x1c] sm:$0xf]
        %v841 = vld [vmem:[%s548 + $0x20] sm:$0xf]
        %v842 = vld [vmem:[%s548 + $0x24] sm:$0xf]
        %v843 = vld [vmem:[%s548 + $0x28] sm:$0xf]
        %v844 = vld [vmem:[%s548 + $0x2c] sm:$0xf]
        %v845 = vld [vmem:[%s548 + $0x30] sm:$0xf]
        %v846 = vld [vmem:[%s548 + $0x34] sm:$0xf]
        %v847 = vld [vmem:[%s548 + $0x38] sm:$0xf]
        %v848 = vld [vmem:[%s548 + $0x3c] sm:$0xf]
        %v849 = vld [vmem:[%s548 + $0x40] sm:$0xf]
        %v850 = vld [vmem:[%s548 + $0x44] sm:$0xf]
        %v851 = vld [vmem:[%s548 + $0x48] sm:$0xf]
        %v852 = vld [vmem:[%s548 + $0x4c] sm:$0xf]
        %v853 = vld [vmem:[%s548 + $0x50] sm:$0xf]
        %v854 = vld [vmem:[%s548 + $0x54] sm:$0xf]
        %v855 = vld [vmem:[%s548 + $0x58] sm:$0xf]
        %v856 = vld [vmem:[%s548 + $0x5c] sm:$0xf]
        %v857 = vld [vmem:[%s548 + $0x60] sm:$0xf]
        %v858 = vld [vmem:[%s548 + $0x64] sm:$0xf]
        %v859 = vld [vmem:[%s548 + $0x68] sm:$0xf]
        %v860 = vld [vmem:[%s548 + $0x6c] sm:$0xf]
        %v861 = vld [vmem:[%s548 + $0x70] sm:$0xf]
        %v862 = vld [vmem:[%s548 + $0x74] sm:$0xf]
        %v863 = vld [vmem:[%s548 + $0x78] sm:$0xf]
        %v864 = vld [vmem:[%s548 + $0x7c] sm:$0xf]
        %v897 = vunpack.c.l.b16 %v833
        %v898 = vunpack.c.l.b16 %v834
        %v899 = vunpack.c.l.b16 %v835
        %v900 = vunpack.c.l.b16 %v836
        %v901 = vunpack.c.l.b16 %v837
        %v902 = vunpack.c.l.b16 %v838
        %v903 = vunpack.c.l.b16 %v839
        %v904 = vunpack.c.l.b16 %v840
        %v905 = vunpack.c.l.b16 %v841
        %v906 = vunpack.c.l.b16 %v842
        %v907 = vunpack.c.l.b16 %v843
        %v908 = vunpack.c.l.b16 %v844
        %v909 = vunpack.c.l.b16 %v845
        %v910 = vunpack.c.l.b16 %v846
        %v911 = vunpack.c.l.b16 %v847
        %v912 = vunpack.c.l.b16 %v848
        %v913 = vunpack.c.l.b16 %v849
        %v914 = vunpack.c.l.b16 %v850
        %v915 = vunpack.c.l.b16 %v851
        %v916 = vunpack.c.l.b16 %v852
        %v917 = vunpack.c.l.b16 %v853
        %v918 = vunpack.c.l.b16 %v854
        %v919 = vunpack.c.l.b16 %v855
        %v920 = vunpack.c.l.b16 %v856
        %v921 = vunpack.c.l.b16 %v857
        %v922 = vunpack.c.l.b16 %v858
        %v923 = vunpack.c.l.b16 %v859
        %v924 = vunpack.c.l.b16 %v860
        %v925 = vunpack.c.l.b16 %v861
        %v926 = vunpack.c.l.b16 %v862
        %v927 = vunpack.c.l.b16 %v863
        %v928 = vunpack.c.l.b16 %v864
        %v929 = vpack.c.b16 %v898, %v897
        %v930 = vpack.c.b16 %v900, %v899
        %v931 = vpack.c.b16 %v902, %v901
        %v932 = vpack.c.b16 %v904, %v903
        %v933 = vpack.c.b16 %v906, %v905
        %v934 = vpack.c.b16 %v908, %v907
        %v935 = vpack.c.b16 %v910, %v909
        %v936 = vpack.c.b16 %v912, %v911
        %v937 = vpack.c.b16 %v914, %v913
        %v938 = vpack.c.b16 %v916, %v915
        %v939 = vpack.c.b16 %v918, %v917
        %v940 = vpack.c.b16 %v920, %v919
        %v941 = vpack.c.b16 %v922, %v921
        %v942 = vpack.c.b16 %v924, %v923
        %v943 = vpack.c.b16 %v926, %v925
        %v944 = vpack.c.b16 %v928, %v927
        %961 = vmatpush.bf16.msra.mxu0 %v936
        %962 = vmatpush.bf16.msra.mxu0 %v935
        %963 = vmatpush.bf16.msra.mxu0 %v934
        %964 = vmatpush.bf16.msra.mxu0 %v933
        %965 = vmatpush.bf16.msra.mxu0 %v932
        %966 = vmatpush.bf16.msra.mxu0 %v931
        %967 = vmatpush.bf16.msra.mxu0 %v930
        %968 = vmatpush.bf16.msra.mxu0 %v929
        %969 = vmatmul.bf16.gmra.mxu0 %v667
        %v970 = vpop.f32.mrf.mxu0
        %v971 = vadd.f32 0.0, %v970
        %v972 = vpop.f32.mrf.mxu0
        %v973 = vadd.f32 0.0, %v972
        %974 = vdwg.mxu0
        %975 = vmatpush.bf16.msra.mxu0 %v944
        %976 = vmatpush.bf16.msra.mxu0 %v943
        %977 = vmatpush.bf16.msra.mxu0 %v942
        %978 = vmatpush.bf16.msra.mxu0 %v941
        %979 = vmatpush.bf16.msra.mxu0 %v940
        %980 = vmatpush.bf16.msra.mxu0 %v939
        %981 = vmatpush.bf16.msra.mxu0 %v938
        %982 = vmatpush.bf16.msra.mxu0 %v937
        %983 = vmatmul.bf16.gmra.mxu0 %v668
        %v984 = vpop.f32.mrf.mxu0
        %v985 = vadd.f32 %v971, %v984
        %v986 = vpop.f32.mrf.mxu0
        %v987 = vadd.f32 %v973, %v986
        %988 = vdwg.mxu0
        %v989 = vadd.f32 %v831, %v985
        %v990 = vadd.f32 %v832, %v987
        %991 = vst [vmem:[#allocation3] sm:$0xff] %v989
        %992 = vst [vmem:[#allocation3 + $0x8] sm:$0xff] %v990
        %v993 = vld [vmem:[#allocation4] sm:$0xff]
        %v994 = vld [vmem:[#allocation4 + $0x8] sm:$0xff]
        %v995 = vld [vmem:[%s558] sm:$0xf]
        %v996 = vld [vmem:[%s558 + $0x4] sm:$0xf]
        %v997 = vld [vmem:[%s558 + $0x8] sm:$0xf]
        %v998 = vld [vmem:[%s558 + $0xc] sm:$0xf]
        %v999 = vld [vmem:[%s558 + $0x10] sm:$0xf]
        %v1000 = vld [vmem:[%s558 + $0x14] sm:$0xf]
        %v1001 = vld [vmem:[%s558 + $0x18] sm:$0xf]
        %v1002 = vld [vmem:[%s558 + $0x1c] sm:$0xf]
        %v1003 = vld [vmem:[%s558 + $0x20] sm:$0xf]
        %v1004 = vld [vmem:[%s558 + $0x24] sm:$0xf]
        %v1005 = vld [vmem:[%s558 + $0x28] sm:$0xf]
        %v1006 = vld [vmem:[%s558 + $0x2c] sm:$0xf]
        %v1007 = vld [vmem:[%s558 + $0x30] sm:$0xf]
        %v1008 = vld [vmem:[%s558 + $0x34] sm:$0xf]
        %v1009 = vld [vmem:[%s558 + $0x38] sm:$0xf]
        %v1010 = vld [vmem:[%s558 + $0x3c] sm:$0xf]
        %v1011 = vld [vmem:[%s558 + $0x40] sm:$0xf]
        %v1012 = vld [vmem:[%s558 + $0x44] sm:$0xf]
        %v1013 = vld [vmem:[%s558 + $0x48] sm:$0xf]
        %v1014 = vld [vmem:[%s558 + $0x4c] sm:$0xf]
        %v1015 = vld [vmem:[%s558 + $0x50] sm:$0xf]
        %v1016 = vld [vmem:[%s558 + $0x54] sm:$0xf]
        %v1017 = vld [vmem:[%s558 + $0x58] sm:$0xf]
        %v1018 = vld [vmem:[%s558 + $0x5c] sm:$0xf]
        %v1019 = vld [vmem:[%s558 + $0x60] sm:$0xf]
        %v1020 = vld [vmem:[%s558 + $0x64] sm:$0xf]
        %v1021 = vld [vmem:[%s558 + $0x68] sm:$0xf]
        %v1022 = vld [vmem:[%s558 + $0x6c] sm:$0xf]
        %v1023 = vld [vmem:[%s558 + $0x70] sm:$0xf]
        %v1024 = vld [vmem:[%s558 + $0x74] sm:$0xf]
        %v1025 = vld [vmem:[%s558 + $0x78] sm:$0xf]
        %v1026 = vld [vmem:[%s558 + $0x7c] sm:$0xf]
        %v1027 = vld [vmem:[%s568] sm:$0xf]
        %v1028 = vld [vmem:[%s568 + $0x4] sm:$0xf]
        %v1029 = vld [vmem:[%s568 + $0x8] sm:$0xf]
        %v1030 = vld [vmem:[%s568 + $0xc] sm:$0xf]
        %v1031 = vld [vmem:[%s568 + $0x10] sm:$0xf]
        %v1032 = vld [vmem:[%s568 + $0x14] sm:$0xf]
        %v1033 = vld [vmem:[%s568 + $0x18] sm:$0xf]
        %v1034 = vld [vmem:[%s568 + $0x1c] sm:$0xf]
        %v1035 = vld [vmem:[%s568 + $0x20] sm:$0xf]
        %v1036 = vld [vmem:[%s568 + $0x24] sm:$0xf]
        %v1037 = vld [vmem:[%s568 + $0x28] sm:$0xf]
        %v1038 = vld [vmem:[%s568 + $0x2c] sm:$0xf]
        %v1039 = vld [vmem:[%s568 + $0x30] sm:$0xf]
        %v1040 = vld [vmem:[%s568 + $0x34] sm:$0xf]
        %v1041 = vld [vmem:[%s568 + $0x38] sm:$0xf]
        %v1042 = vld [vmem:[%s568 + $0x3c] sm:$0xf]
        %v1043 = vld [vmem:[%s568 + $0x40] sm:$0xf]
        %v1044 = vld [vmem:[%s568 + $0x44] sm:$0xf]
        %v1045 = vld [vmem:[%s568 + $0x48] sm:$0xf]
        %v1046 = vld [vmem:[%s568 + $0x4c] sm:$0xf]
        %v1047 = vld [vmem:[%s568 + $0x50] sm:$0xf]
        %v1048 = vld [vmem:[%s568 + $0x54] sm:$0xf]
        %v1049 = vld [vmem:[%s568 + $0x58] sm:$0xf]
        %v1050 = vld [vmem:[%s568 + $0x5c] sm:$0xf]
        %v1051 = vld [vmem:[%s568 + $0x60] sm:$0xf]
        %v1052 = vld [vmem:[%s568 + $0x64] sm:$0xf]
        %v1053 = vld [vmem:[%s568 + $0x68] sm:$0xf]
        %v1054 = vld [vmem:[%s568 + $0x6c] sm:$0xf]
        %v1055 = vld [vmem:[%s568 + $0x70] sm:$0xf]
        %v1056 = vld [vmem:[%s568 + $0x74] sm:$0xf]
        %v1057 = vld [vmem:[%s568 + $0x78] sm:$0xf]
        %v1058 = vld [vmem:[%s568 + $0x7c] sm:$0xf]
        %v1091 = vunpack.c.l.b16 %v1027
        %v1092 = vunpack.c.l.b16 %v1028
        %v1093 = vunpack.c.l.b16 %v1029
        %v1094 = vunpack.c.l.b16 %v1030
        %v1095 = vunpack.c.l.b16 %v1031
        %v1096 = vunpack.c.l.b16 %v1032
        %v1097 = vunpack.c.l.b16 %v1033
        %v1098 = vunpack.c.l.b16 %v1034
        %v1099 = vunpack.c.l.b16 %v1035
        %v1100 = vunpack.c.l.b16 %v1036
        %v1101 = vunpack.c.l.b16 %v1037
        %v1102 = vunpack.c.l.b16 %v1038
        %v1103 = vunpack.c.l.b16 %v1039
        %v1104 = vunpack.c.l.b16 %v1040
        %v1105 = vunpack.c.l.b16 %v1041
        %v1106 = vunpack.c.l.b16 %v1042
        %v1107 = vunpack.c.l.b16 %v1043
        %v1108 = vunpack.c.l.b16 %v1044
        %v1109 = vunpack.c.l.b16 %v1045
        %v1110 = vunpack.c.l.b16 %v1046
        %v1111 = vunpack.c.l.b16 %v1047
        %v1112 = vunpack.c.l.b16 %v1048
        %v1113 = vunpack.c.l.b16 %v1049
        %v1114 = vunpack.c.l.b16 %v1050
        %v1115 = vunpack.c.l.b16 %v1051
        %v1116 = vunpack.c.l.b16 %v1052
        %v1117 = vunpack.c.l.b16 %v1053
        %v1118 = vunpack.c.l.b16 %v1054
        %v1119 = vunpack.c.l.b16 %v1055
        %v1120 = vunpack.c.l.b16 %v1056
        %v1121 = vunpack.c.l.b16 %v1057
        %v1122 = vunpack.c.l.b16 %v1058
        %v1123 = vpack.c.b16 %v1092, %v1091
        %v1124 = vpack.c.b16 %v1094, %v1093
        %v1125 = vpack.c.b16 %v1096, %v1095
        %v1126 = vpack.c.b16 %v1098, %v1097
        %v1127 = vpack.c.b16 %v1100, %v1099
        %v1128 = vpack.c.b16 %v1102, %v1101
        %v1129 = vpack.c.b16 %v1104, %v1103
        %v1130 = vpack.c.b16 %v1106, %v1105
        %v1131 = vpack.c.b16 %v1108, %v1107
        %v1132 = vpack.c.b16 %v1110, %v1109
        %v1133 = vpack.c.b16 %v1112, %v1111
        %v1134 = vpack.c.b16 %v1114, %v1113
        %v1135 = vpack.c.b16 %v1116, %v1115
        %v1136 = vpack.c.b16 %v1118, %v1117
        %v1137 = vpack.c.b16 %v1120, %v1119
        %v1138 = vpack.c.b16 %v1122, %v1121
        %1155 = vmatpush.bf16.msra.mxu0 %v1130
        %1156 = vmatpush.bf16.msra.mxu0 %v1129
        %1157 = vmatpush.bf16.msra.mxu0 %v1128
        %1158 = vmatpush.bf16.msra.mxu0 %v1127
        %1159 = vmatpush.bf16.msra.mxu0 %v1126
        %1160 = vmatpush.bf16.msra.mxu0 %v1125
        %1161 = vmatpush.bf16.msra.mxu0 %v1124
        %1162 = vmatpush.bf16.msra.mxu0 %v1123
        %1163 = vmatmul.bf16.gmra.mxu0 %v667
        %v1164 = vpop.f32.mrf.mxu0
        %v1165 = vadd.f32 0.0, %v1164
        %v1166 = vpop.f32.mrf.mxu0
        %v1167 = vadd.f32 0.0, %v1166
        %1168 = vdwg.mxu0
        %1169 = vmatpush.bf16.msra.mxu0 %v1138
        %1170 = vmatpush.bf16.msra.mxu0 %v1137
        %1171 = vmatpush.bf16.msra.mxu0 %v1136
        %1172 = vmatpush.bf16.msra.mxu0 %v1135
        %1173 = vmatpush.bf16.msra.mxu0 %v1134
        %1174 = vmatpush.bf16.msra.mxu0 %v1133
        %1175 = vmatpush.bf16.msra.mxu0 %v1132
        %1176 = vmatpush.bf16.msra.mxu0 %v1131
        %1177 = vmatmul.bf16.gmra.mxu0 %v668
        %v1178 = vpop.f32.mrf.mxu0
        %v1179 = vadd.f32 %v1165, %v1178
        %v1180 = vpop.f32.mrf.mxu0
        %v1181 = vadd.f32 %v1167, %v1180
        %1182 = vdwg.mxu0
        %v1215 = vunpack.c.l.b16 %v995
        %v1216 = vunpack.c.l.b16 %v996
        %v1217 = vunpack.c.l.b16 %v997
        %v1218 = vunpack.c.l.b16 %v998
        %v1219 = vunpack.c.l.b16 %v999
        %v1220 = vunpack.c.l.b16 %v1000
        %v1221 = vunpack.c.l.b16 %v1001
        %v1222 = vunpack.c.l.b16 %v1002
        %v1223 = vunpack.c.l.b16 %v1003
        %v1224 = vunpack.c.l.b16 %v1004
        %v1225 = vunpack.c.l.b16 %v1005
        %v1226 = vunpack.c.l.b16 %v1006
        %v1227 = vunpack.c.l.b16 %v1007
        %v1228 = vunpack.c.l.b16 %v1008
        %v1229 = vunpack.c.l.b16 %v1009
        %v1230 = vunpack.c.l.b16 %v1010
        %v1231 = vunpack.c.l.b16 %v1011
        %v1232 = vunpack.c.l.b16 %v1012
        %v1233 = vunpack.c.l.b16 %v1013
        %v1234 = vunpack.c.l.b16 %v1014
        %v1235 = vunpack.c.l.b16 %v1015
        %v1236 = vunpack.c.l.b16 %v1016
        %v1237 = vunpack.c.l.b16 %v1017
        %v1238 = vunpack.c.l.b16 %v1018
        %v1239 = vunpack.c.l.b16 %v1019
        %v1240 = vunpack.c.l.b16 %v1020
        %v1241 = vunpack.c.l.b16 %v1021
        %v1242 = vunpack.c.l.b16 %v1022
        %v1243 = vunpack.c.l.b16 %v1023
        %v1244 = vunpack.c.l.b16 %v1024
        %v1245 = vunpack.c.l.b16 %v1025
        %v1246 = vunpack.c.l.b16 %v1026
        %v1247 = vpack.c.b16 %v1216, %v1215
        %v1248 = vpack.c.b16 %v1218, %v1217
        %v1249 = vpack.c.b16 %v1220, %v1219
        %v1250 = vpack.c.b16 %v1222, %v1221
        %v1251 = vpack.c.b16 %v1224, %v1223
        %v1252 = vpack.c.b16 %v1226, %v1225
        %v1253 = vpack.c.b16 %v1228, %v1227
        %v1254 = vpack.c.b16 %v1230, %v1229
        %v1255 = vpack.c.b16 %v1232, %v1231
        %v1256 = vpack.c.b16 %v1234, %v1233
        %v1257 = vpack.c.b16 %v1236, %v1235
        %v1258 = vpack.c.b16 %v1238, %v1237
        %v1259 = vpack.c.b16 %v1240, %v1239
        %v1260 = vpack.c.b16 %v1242, %v1241
        %v1261 = vpack.c.b16 %v1244, %v1243
        %v1262 = vpack.c.b16 %v1246, %v1245
        %1279 = vmatpush.bf16.msra.mxu0 %v1254
        %1280 = vmatpush.bf16.msra.mxu0 %v1253
        %1281 = vmatpush.bf16.msra.mxu0 %v1252
        %1282 = vmatpush.bf16.msra.mxu0 %v1251
        %1283 = vmatpush.bf16.msra.mxu0 %v1250
        %1284 = vmatpush.bf16.msra.mxu0 %v1249
        %1285 = vmatpush.bf16.msra.mxu0 %v1248
        %1286 = vmatpush.bf16.msra.mxu0 %v1247
        %1287 = vmatmul.bf16.gmra.mxu0 %v661
        %v1288 = vpop.f32.mrf.mxu0
        %v1289 = vadd.f32 %v1179, %v1288
        %v1290 = vpop.f32.mrf.mxu0
        %v1291 = vadd.f32 %v1181, %v1290
        %1292 = vdwg.mxu0
        %1293 = vmatpush.bf16.msra.mxu0 %v1262
        %1294 = vmatpush.bf16.msra.mxu0 %v1261
        %1295 = vmatpush.bf16.msra.mxu0 %v1260
        %1296 = vmatpush.bf16.msra.mxu0 %v1259
        %1297 = vmatpush.bf16.msra.mxu0 %v1258
        %1298 = vmatpush.bf16.msra.mxu0 %v1257
        %1299 = vmatpush.bf16.msra.mxu0 %v1256
        %1300 = vmatpush.bf16.msra.mxu0 %v1255
        %1301 = vmatmul.bf16.gmra.mxu0 %v662
        %v1302 = vpop.f32.mrf.mxu0
        %v1303 = vadd.f32 %v1289, %v1302
        %v1304 = vpop.f32.mrf.mxu0
        %v1305 = vadd.f32 %v1291, %v1304
        %1306 = vdwg.mxu0
        %v1307 = vadd.f32 %v993, %v1303
        %v1308 = vadd.f32 %v994, %v1305
        %1309 = vst [vmem:[#allocation4] sm:$0xff] %v1307
        %1310 = vst [vmem:[#allocation4 + $0x8] sm:$0xff] %v1308
        %p1311 = scmp.eq.s32.totalorder %s42, 1
        // Predicated region
        $region89: #{tpu_custom_call.1} parent=51 // pred_check
          %p1312 = pneg %p1311
        $region90: #{tpu_custom_call.1} parent=51 // pred_check_branch
          %1314 = sbr.rel (%p1312) target = $region92
        $region91: #{tpu_custom_call.1} parent=51 // pred_region
          %v1315 = vld [vmem:[#allocation17] sm:$0x1]
          %v1316 = vld [vmem:[#allocation17 + $0x1] sm:$0x1]
          %v1317 = vld [vmem:[#allocation17 + $0x2] sm:$0x1]
          %v1318 = vld [vmem:[#allocation17 + $0x3] sm:$0x1]
          %v1319 = vld [vmem:[#allocation2] sm:$0xff]
          %v1320 = vld [vmem:[#allocation2 + $0x8] sm:$0xff]
          %v1321 = vperm.slane %v1315, 0
          %v1322 = vadd.f32 %v1319, %v1321
          %v1323 = vadd.f32 %v1320, %v1321
          %v1324 = vmax.f32 %v1322, 0.0
          %v1325 = vmax.f32 %v1323, 0.0
          %v1326 = vpack.c.bf16 %v1324, %v1324
          %v1327 = vpack.c.bf16 %v1325, %v1325
          %1328 = vst [vmem:[#allocation5] sm:$0xf] %v1326
          %1329 = vst [vmem:[#allocation5 + $0x4] sm:$0xf] %v1327
          %v1330 = vld [vmem:[#allocation3] sm:$0xff]
          %v1331 = vld [vmem:[#allocation3 + $0x8] sm:$0xff]
          %v1332 = vperm.slane %v1316, 0
          %v1333 = vadd.f32 %v1330, %v1332
          %v1334 = vadd.f32 %v1331, %v1332
          %v1335 = vmax.f32 %v1333, 0.0
          %v1336 = vmax.f32 %v1334, 0.0
          %v1337 = vpack.c.bf16 %v1335, %v1335
          %v1338 = vpack.c.bf16 %v1336, %v1336
          %1339 = vst [vmem:[#allocation5 + $0x8] sm:$0xf] %v1337
          %1340 = vst [vmem:[#allocation5 + $0xc] sm:$0xf] %v1338
          %v1341 = vld [vmem:[#allocation4] sm:$0xff]
          %v1342 = vld [vmem:[#allocation4 + $0x8] sm:$0xff]
          %v1343 = vperm.slane %v1317, 0
          %v1344 = vadd.f32 %v1341, %v1343
          %v1345 = vadd.f32 %v1342, %v1343
          %v1346 = vmax.f32 %v1344, 0.0
          %v1347 = vmax.f32 %v1345, 0.0
          %v1348 = vpack.c.bf16 %v1346, %v1346
          %v1349 = vpack.c.bf16 %v1347, %v1347
          %1350 = vst [vmem:[#allocation5 + $0x10] sm:$0xf] %v1348
          %1351 = vst [vmem:[#allocation5 + $0x14] sm:$0xf] %v1349
          %v1352 = vld [vmem:[#allocation5] sm:$0xf]
          %v1353 = vld [vmem:[#allocation5 + $0x4] sm:$0xf]
          %v1354 = vld [vmem:[#allocation5 + $0x8] sm:$0xf]
          %v1355 = vld [vmem:[#allocation5 + $0xc] sm:$0xf]
          %v1356 = vld [vmem:[#allocation5 + $0x10] sm:$0xf]
          %v1357 = vld [vmem:[#allocation5 + $0x14] sm:$0xf]
          %v1358 = vld [vmem:[#allocation18] sm:$0xf]
          %v1359 = vld [vmem:[#allocation18 + $0x4] sm:$0xf]
          %v1360 = vld [vmem:[#allocation18 + $0x8] sm:$0xf]
          %v1361 = vld [vmem:[#allocation18 + $0xc] sm:$0xf]
          %v1362 = vld [vmem:[#allocation18 + $0x10] sm:$0xf]
          %v1363 = vld [vmem:[#allocation18 + $0x14] sm:$0xf]
          %v1364 = vld [vmem:[#allocation18 + $0x18] sm:$0xf]
          %v1365 = vld [vmem:[#allocation18 + $0x1c] sm:$0xf]
          %v1366 = vld [vmem:[#allocation18 + $0x20] sm:$0xf]
          %v1367 = vld [vmem:[#allocation18 + $0x24] sm:$0xf]
          %v1368 = vld [vmem:[#allocation18 + $0x28] sm:$0xf]
          %v1369 = vld [vmem:[#allocation18 + $0x2c] sm:$0xf]
          %v1370 = vld [vmem:[#allocation18 + $0x30] sm:$0xf]
          %v1371 = vld [vmem:[#allocation18 + $0x34] sm:$0xf]
          %v1372 = vld [vmem:[#allocation18 + $0x38] sm:$0xf]
          %v1373 = vld [vmem:[#allocation18 + $0x3c] sm:$0xf]
          %v1374 = vperm.slane %v1318, 0
          %v1381 = vunpack.c.l.b16 %v1352
          %v1382 = vunpack.c.l.b16 %v1353
          %v1383 = vunpack.c.l.b16 %v1354
          %v1384 = vunpack.c.l.b16 %v1355
          %v1385 = vunpack.c.l.b16 %v1356
          %v1386 = vunpack.c.l.b16 %v1357
          %v1387 = vpack.c.b16 %v1382, %v1381
          %v1388 = vpack.c.b16 %v1384, %v1383
          %v1389 = vpack.c.b16 %v1386, %v1385
          %v1409 = vunpack.c.l.b16 %v1358
          %v1410 = vunpack.c.l.b16 %v1359
          %v1411 = vunpack.c.l.b16 %v1360
          %v1412 = vunpack.c.l.b16 %v1361
          %v1413 = vunpack.c.l.b16 %v1362
          %v1414 = vunpack.c.l.b16 %v1363
          %v1415 = vunpack.c.l.b16 %v1364
          %v1416 = vunpack.c.l.b16 %v1365
          %v1417 = vunpack.c.l.b16 %v1366
          %v1418 = vunpack.c.l.b16 %v1367
          %v1419 = vunpack.c.l.b16 %v1368
          %v1420 = vunpack.c.l.b16 %v1369
          %v1421 = vunpack.c.l.b16 %v1370
          %v1422 = vunpack.c.l.b16 %v1371
          %v1423 = vunpack.c.l.b16 %v1372
          %v1424 = vunpack.c.l.b16 %v1373
          %v1425 = vpack.c.b16 %v1410, %v1409
          %v1426 = vpack.c.b16 %v1412, %v1411
          %v1427 = vpack.c.b16 %v1414, %v1413
          %v1428 = vpack.c.b16 %v1416, %v1415
          %v1429 = vpack.c.b16 %v1418, %v1417
          %v1430 = vpack.c.b16 %v1420, %v1419
          %v1431 = vpack.c.b16 %v1422, %v1421
          %v1432 = vpack.c.b16 %v1424, %v1423
          %1441 = vmatpush.bf16.msra.mxu0 %v1432
          %1442 = vmatpush.bf16.msra.mxu0 %v1431
          %1443 = vmatpush.bf16.msra.mxu0 %v1430
          %1444 = vmatpush.bf16.msra.mxu0 %v1429
          %1445 = vmatpush.bf16.msra.mxu0 %v1428
          %1446 = vmatpush.bf16.msra.mxu0 %v1427
          %1447 = vmatpush.bf16.msra.mxu0 %v1426
          %1448 = vmatpush.bf16.msra.mxu0 %v1425
          %1449 = vmatmul.bf16.gmra.mxu0 %v1387
          %v1450 = vpop.f32.mrf.mxu0
          %v1451 = vadd.f32 %v1374, %v1450
          %v1452 = vpop.f32.mrf.mxu0
          %v1453 = vadd.f32 %v1374, %v1452
          %1454 = vmatmul.bf16.gmra.mxu0 %v1388
          %v1455 = vpop.f32.mrf.mxu0
          %v1456 = vadd.f32 %v1374, %v1455
          %v1457 = vpop.f32.mrf.mxu0
          %v1458 = vadd.f32 %v1374, %v1457
          %1459 = vmatmul.bf16.gmra.mxu0 %v1389
          %v1460 = vpop.f32.mrf.mxu0
          %v1461 = vadd.f32 %v1374, %v1460
          %v1462 = vpop.f32.mrf.mxu0
          %v1463 = vadd.f32 %v1374, %v1462
          %1464 = vdwg.mxu0
          %v1465 = vmul.f32 %v1451, %v1451
          %v1466 = vmul.f32 %v1453, %v1453
          %v1467 = vmul.f32 %v1456, %v1456
          %v1468 = vmul.f32 %v1458, %v1458
          %v1469 = vmul.f32 %v1461, %v1461
          %v1470 = vmul.f32 %v1463, %v1463
          %1471 = vadd.xlane.f32.xlu0 %v1465
          %v1472 = vpop.xlane.xlu0 %1471
          %1473 = vadd.xlane.f32.xlu0 %v1466
          %v1474 = vpop.xlane.xlu0 %1473
          %1475 = vadd.xlane.f32.xlu0 %v1467
          %v1476 = vpop.xlane.xlu0 %1475
          %1477 = vadd.xlane.f32.xlu0 %v1468
          %v1478 = vpop.xlane.xlu0 %1477
          %1479 = vadd.xlane.f32.xlu0 %v1469
          %v1480 = vpop.xlane.xlu0 %1479
          %1481 = vadd.xlane.f32.xlu0 %v1470
          %v1482 = vpop.xlane.xlu0 %1481
          %v1483 = vadd.f32 %v1472, 1e-12
          %v1484 = vadd.f32 %v1474, 1e-12
          %v1485 = vadd.f32 %v1476, 1e-12
          %v1486 = vadd.f32 %v1478, 1e-12
          %v1487 = vadd.f32 %v1480, 1e-12
          %v1488 = vadd.f32 %v1482, 1e-12
          %v1489 = vrsqrt.pop %v1483
          %v1490 = vmul.f32 %v1489, %v1483
          %v1491 = vmul.f32 %v1490, %v1489
          %v1492 = vmul.f32 0.5, %v1491
          %v1493 = vsub.f32 1.5, %v1492
          %v1494 = vmul.f32 %v1489, %v1493
          %vm1495 = vweird.f32 %v1483
          %vm1496 = vweird.f32 %v1489
          %vm1497 = vmor %vm1495, %vm1496
          %v1498 = vsel %vm1497, %v1489, %v1494
          %v1499 = vrsqrt.pop %v1484
          %v1500 = vmul.f32 %v1499, %v1484
          %v1501 = vmul.f32 %v1500, %v1499
          %v1502 = vmul.f32 0.5, %v1501
          %v1503 = vsub.f32 1.5, %v1502
          %v1504 = vmul.f32 %v1499, %v1503
          %vm1505 = vweird.f32 %v1484
          %vm1506 = vweird.f32 %v1499
          %vm1507 = vmor %vm1505, %vm1506
          %v1508 = vsel %vm1507, %v1499, %v1504
          %v1509 = vrsqrt.pop %v1485
          %v1510 = vmul.f32 %v1509, %v1485
          %v1511 = vmul.f32 %v1510, %v1509
          %v1512 = vmul.f32 0.5, %v1511
          %v1513 = vsub.f32 1.5, %v1512
          %v1514 = vmul.f32 %v1509, %v1513
          %vm1515 = vweird.f32 %v1485
          %vm1516 = vweird.f32 %v1509
          %vm1517 = vmor %vm1515, %vm1516
          %v1518 = vsel %vm1517, %v1509, %v1514
          %v1519 = vrsqrt.pop %v1486
          %v1520 = vmul.f32 %v1519, %v1486
          %v1521 = vmul.f32 %v1520, %v1519
          %v1522 = vmul.f32 0.5, %v1521
          %v1523 = vsub.f32 1.5, %v1522
          %v1524 = vmul.f32 %v1519, %v1523
          %vm1525 = vweird.f32 %v1486
          %vm1526 = vweird.f32 %v1519
          %vm1527 = vmor %vm1525, %vm1526
          %v1528 = vsel %vm1527, %v1519, %v1524
          %v1529 = vrsqrt.pop %v1487
          %v1530 = vmul.f32 %v1529, %v1487
          %v1531 = vmul.f32 %v1530, %v1529
          %v1532 = vmul.f32 0.5, %v1531
          %v1533 = vsub.f32 1.5, %v1532
          %v1534 = vmul.f32 %v1529, %v1533
          %vm1535 = vweird.f32 %v1487
          %vm1536 = vweird.f32 %v1529
          %vm1537 = vmor %vm1535, %vm1536
          %v1538 = vsel %vm1537, %v1529, %v1534
          %v1539 = vrsqrt.pop %v1488
          %v1540 = vmul.f32 %v1539, %v1488
          %v1541 = vmul.f32 %v1540, %v1539
          %v1542 = vmul.f32 0.5, %v1541
          %v1543 = vsub.f32 1.5, %v1542
          %v1544 = vmul.f32 %v1539, %v1543
          %vm1545 = vweird.f32 %v1488
          %vm1546 = vweird.f32 %v1539
          %vm1547 = vmor %vm1545, %vm1546
          %v1548 = vsel %vm1547, %v1539, %v1544
          %v1549 = vmul.f32 %v1451, %v1498
          %v1550 = vmul.f32 %v1453, %v1508
          %v1551 = vmul.f32 %v1456, %v1518
          %v1552 = vmul.f32 %v1458, %v1528
          %v1553 = vmul.f32 %v1461, %v1538
          %v1554 = vmul.f32 %v1463, %v1548
          %1555 = vst [vmem:[#allocation20] sm:$0xff] %v1549
          %1556 = vst [vmem:[#allocation20 + $0x8] sm:$0xff] %v1550
          %1557 = vst [vmem:[#allocation21] sm:$0xff] %v1551
          %1558 = vst [vmem:[#allocation21 + $0x8] sm:$0xff] %v1552
          %1559 = vst [vmem:[#allocation23] sm:$0xff] %v1553
          %1560 = vst [vmem:[#allocation23 + $0x8] sm:$0xff] %v1554
        $region92: #{tpu_custom_call.1} parent=51 // pred_fallthru
          _
        // Predicated region
        $region93: #{tpu_custom_call.1} parent=51 // pred_check
          %p1561 = pneg %p269
        $region94: #{tpu_custom_call.1} parent=51 // pred_check_branch
          %1563 = sbr.rel (%p1561) target = $region96
        $region95: #{tpu_custom_call.1} parent=51 // pred_region
          %s1564 = smul.u32 2, %s41
          %1566 = vsyncadd [#allocation8], 0
          %s1567 = smul.addr %s1564, 8
          %s1568 = scalar_lea.hbm %s8, %s1567
          %s1569 = sshll.u32 [#allocation20], 4
          %s1570 = int_to_ptr.vmem [resolvable:$true] %s1569
          %s1571 = sshll.u32 %s1568, 4
          %s1572 = int_to_ptr.hbm [resolvable:$true] %s1571
          %1577 = dma.vmem_to_hbm [thread:$0]  %s1570, 256, %s1572, [#allocation8], 128, 128, 8
        $region96: #{tpu_custom_call.1} parent=51 // pred_fallthru
          _
        // Predicated region
        $region97: #{tpu_custom_call.1} parent=51 // pred_check
          %p1578 = pneg %p295
        $region98: #{tpu_custom_call.1} parent=51 // pred_check_branch
          %1580 = sbr.rel (%p1578) target = $region100
        $region99: #{tpu_custom_call.1} parent=51 // pred_region
          %s1581 = smul.u32 2, %s41
          %1583 = vsyncadd [#allocation22], 0
          %s1584 = smul.addr %s1581, 8
          %s1585 = scalar_lea.hbm %s9, %s1584
          %s1586 = sshll.u32 [#allocation21], 4
          %s1587 = int_to_ptr.vmem [resolvable:$true] %s1586
          %s1588 = sshll.u32 %s1585, 4
          %s1589 = int_to_ptr.hbm [resolvable:$true] %s1588
          %1594 = dma.vmem_to_hbm [thread:$0]  %s1587, 256, %s1589, [#allocation22], 128, 128, 8
        $region100: #{tpu_custom_call.1} parent=51 // pred_fallthru
          _
        // Predicated region
        $region101: #{tpu_custom_call.1} parent=51 // pred_check
          %p1595 = pneg %p321
        $region102: #{tpu_custom_call.1} parent=51 // pred_check_branch
          %1597 = sbr.rel (%p1595) target = $region104
        $region103: #{tpu_custom_call.1} parent=51 // pred_region
          %s1598 = smul.u32 2, %s41
          %1600 = vsyncadd [#allocation22], 0
          %s1601 = smul.addr %s1598, 8
          %s1602 = scalar_lea.hbm %s10, %s1601
          %s1603 = sshll.u32 [#allocation23], 4
          %s1604 = int_to_ptr.vmem [resolvable:$true] %s1603
          %s1605 = sshll.u32 %s1602, 4
          %s1606 = int_to_ptr.hbm [resolvable:$true] %s1605
          %1611 = dma.vmem_to_hbm [thread:$0]  %s1604, 256, %s1606, [#allocation22], 128, 128, 8
        $region104: #{tpu_custom_call.1} parent=51 // pred_fallthru
          _
        // Predicated region
        $region105: #{tpu_custom_call.1} parent=51 // pred_check
          %p1612 = pneg %p269
        $region106: #{tpu_custom_call.1} parent=51 // pred_check_branch
          %1614 = sbr.rel (%p1612) target = $region108
        $region107: #{tpu_custom_call.1} parent=51 // pred_region
          %1616 = dma.done [#allocation8], 256
        $region108: #{tpu_custom_call.1} parent=51 // pred_fallthru
          _
        // Predicated region
        $region109: #{tpu_custom_call.1} parent=51 // pred_check
          %p1617 = pneg %p295
        $region110: #{tpu_custom_call.1} parent=51 // pred_check_branch
          %1619 = sbr.rel (%p1617) target = $region112
        $region111: #{tpu_custom_call.1} parent=51 // pred_region
          %1621 = dma.done [#allocation22], 256
        $region112: #{tpu_custom_call.1} parent=51 // pred_fallthru
          _
        // Predicated region
        $region113: #{tpu_custom_call.1} parent=51 // pred_check
          %p1622 = pneg %p321
        $region114: #{tpu_custom_call.1} parent=51 // pred_check_branch
          %1624 = sbr.rel (%p1622) target = $region116
        $region115: #{tpu_custom_call.1} parent=51 // pred_region
          %1626 = dma.done [#allocation22], 256
        $region116: #{tpu_custom_call.1} parent=51 // pred_fallthru
          _
      $region52: #{tpu_custom_call.1} parent=5 // pred_fallthru
        _
      %p1627 = scmp.le.s32.totalorder 2, %s32
      // Predicated region
      $region117: #{tpu_custom_call.1} parent=5 // pred_check
        %p1628 = pneg %p1627
      $region118: #{tpu_custom_call.1} parent=5 // pred_check_branch
        %1630 = sbr.rel (%p1628) target = $region120
      $region119: #{tpu_custom_call.1} parent=5 // pred_region
        %s1631 = ssub.s32 %s32, 2
      $region120: #{tpu_custom_call.1} parent=5 // pred_fallthru
        _
    $region6: #{tpu_custom_call.1} parent=1 // loop_footer
      %s36 = sadd.s32 1, %s32
    $region7: #{tpu_custom_call.1} parent=1 // loop_footer_branch
      %31 = sbr.rel target = $region3
    $region8: #{tpu_custom_call.1} parent=1 // loop_exit
      _
    %1632 = vsyncpa [#allocation7], 1
    %s1633 = scalar_lea.sflag [#allocation7], 1
    %1634 = vsyncpa %s1633, 1
    %1635 = vsyncpa [#allocation10], 1
    %s1636 = scalar_lea.sflag [#allocation10], 1
    %1637 = vsyncpa %s1636, 1
    %1638 = vsyncpa [#allocation13], 1
    %s1639 = scalar_lea.sflag [#allocation13], 1
    %1640 = vsyncpa %s1639, 1
    %1641 = vsyncpa [#allocation16], 1
    %s1642 = scalar_lea.sflag [#allocation16], 1
    %1643 = vsyncpa %s1642, 1
    %1644 = vsyncpa [#allocation19], 1
    %1645 = vsyncpa [#allocation8], 1
    %s1646 = scalar_lea.sflag [#allocation8], 1
    %1647 = vsyncpa %s1646, 1
    %1648 = vsyncpa [#allocation22], 1

</llo_original>
